<compile_context>
chip_gen: v7x
topology: tpu7x:2x2x1
jax: 0.10.0
libtpu: 0.0.40
codegen_flags: <defaults>
</compile_context>

<pallas_src>
import jax
import jax.numpy as jnp
import numpy as np
from jax.experimental import pallas as pl
from jax.experimental.pallas import tpu as pltpu


def clam_mb_kernel(h_ref, wfc_ref, bfc_ref, wa_ref, ba_ref, wb_ref, bb_ref,
                   wc_ref, bc_ref, wcls_ref, bcls_ref,
                   logits_ref, araw_ref):
    f32 = jnp.float32
    n_classes = wc_ref.shape[0]

    # ---- per-instance features + gated attention (MXU, f32 accumulation) ----
    h1 = jnp.maximum(
        jnp.dot(h_ref[...], wfc_ref[...], preferred_element_type=f32) + bfc_ref[...],
        0.0)                                                         # [N, H] f32
    h1_lp = h1.astype(wa_ref.dtype)
    a = jnp.tanh(
        jnp.dot(h1_lp, wa_ref[...], preferred_element_type=f32) + ba_ref[...])
    b = jax.nn.sigmoid(
        jnp.dot(h1_lp, wb_ref[...], preferred_element_type=f32) + bb_ref[...])
    gated = a * b                                                    # [N, D] f32

    # ---- per-class attention softmax + pooling + bag classifier (VPU/XLU/EUP) ----
    for c in range(n_classes):        # static unroll (n_classes is small)
        # attention logit for branch c: VPU multiply + lane reduce (no lane-1 MXU matmul)
        alogit_c = (jnp.sum(gated * wc_ref[c:c + 1, :], axis=1, keepdims=True)
                    + bc_ref[0:1, c:c + 1])                          # [N, 1]
        araw_ref[:, c:c + 1] = alogit_c

        # softmax over instances (f32)
        m_c = jnp.max(alogit_c, axis=0, keepdims=True)               # [1, 1]
        e_c = jnp.exp(alogit_c - m_c)                                # [N, 1]
        s_c = jnp.sum(e_c, axis=0, keepdims=True)                    # [1, 1]
        att_c = e_c * pl.reciprocal(s_c, approx=True)                # [N, 1]

        # attention pooling: M[c] = att_c^T @ h1 as broadcast-multiply + sublane reduce
        M_c = jnp.sum(att_c * h1, axis=0, keepdims=True)             # [1, H]

        # per-class bag classifier Linear(H, 1)
        logits_ref[0:1, c:c + 1] = (
            jnp.sum(M_c * wcls_ref[c:c + 1, :], axis=1, keepdims=True)
            + bcls_ref[0:1, c:c + 1])                                # [1, 1]


def clam_mb_forward(h, params, *, compute_dtype=jnp.bfloat16):
    N, E = h.shape
    H = params["w_fc"].shape[1]
    D = params["w_a"].shape[1]
    C = params["w_c"].shape[0]

    cd = compute_dtype
    h_lp = h.astype(cd)
    wfc = params["w_fc"].astype(cd)
    wa = params["w_a"].astype(cd)
    wb = params["w_b"].astype(cd)

    def full(shape):
        return pl.BlockSpec(shape, lambda i: (0,) * len(shape))

    logits, araw = pl.pallas_call(
        clam_mb_kernel,
        out_shape=(jax.ShapeDtypeStruct((1, C), jnp.float32),
                   jax.ShapeDtypeStruct((N, C), jnp.float32)),
        grid=(1,),
        in_specs=[
            full((N, E)),
            full((E, H)), full((1, H)),
            full((H, D)), full((1, D)),
            full((H, D)), full((1, D)),
            full((C, D)), full((1, C)),
            full((C, H)), full((1, C)),
        ],
        out_specs=(full((1, C)), full((N, C))),
        compiler_params=pltpu.CompilerParams(dimension_semantics=("arbitrary",)),
    )(h_lp, wfc, params["b_fc"], wa, params["b_a"], wb, params["b_b"],
      params["w_c"], params["b_c"], params["w_cls"], params["b_cls"])

    A_raw = araw.T                                   # [C, N] (matches torch.transpose(A,1,0))
    Y_prob = jax.nn.softmax(logits, axis=1)
    Y_hat = jnp.argmax(logits, axis=1).reshape(1, 1)
    return logits, Y_prob, Y_hat, A_raw


# ---------------- Pure-JAX reference (same dtype casts, for validation) ----------------
def reference_forward(h, p, *, compute_dtype=jnp.bfloat16):
    f32 = jnp.float32
    cd = compute_dtype
    hi = jax.lax.Precision.HIGHEST
    h1 = jax.nn.relu(
        jnp.dot(h.astype(cd), p["w_fc"].astype(cd), preferred_element_type=f32)
        + p["b_fc"])
    h1_lp = h1.astype(cd)
    a = jnp.tanh(jnp.dot(h1_lp, p["w_a"].astype(cd), preferred_element_type=f32) + p["b_a"])
    b = jax.nn.sigmoid(jnp.dot(h1_lp, p["w_b"].astype(cd), preferred_element_type=f32) + p["b_b"])
    A_logit = jnp.dot(a * b, p["w_c"].T, precision=hi) + p["b_c"]    # [N, C]
    A_raw = A_logit.T                                                # [C, N]
    A = jax.nn.softmax(A_raw, axis=1)
    M = jnp.dot(A, h1, precision=hi)                                 # [C, H]
    logits = jnp.sum(M * p["w_cls"], axis=1, keepdims=True).T + p["b_cls"]  # [1, C]
    Y_prob = jax.nn.softmax(logits, axis=1)
    Y_hat = jnp.argmax(logits, axis=1).reshape(1, 1)
    return logits, Y_prob, Y_hat, A_raw


def init_params(key, E, H, D, C):
    ks = jax.random.split(key, 10)
    s = 0.05
    n = jax.random.normal
    return {
        "w_fc": s * n(ks[0], (E, H), jnp.float32),
        "b_fc": s * n(ks[1], (1, H), jnp.float32),
        "w_a":  s * n(ks[2], (H, D), jnp.float32),
        "b_a":  s * n(ks[3], (1, D), jnp.float32),
        "w_b":  s * n(ks[4], (H, D), jnp.float32),
        "b_b":  s * n(ks[5], (1, D), jnp.float32),
        "w_c":  s * n(ks[6], (C, D), jnp.float32),
        "b_c":  s * n(ks[7], (1, C), jnp.float32),
        "w_cls": s * n(ks[8], (C, H), jnp.float32),
        "b_cls": s * n(ks[9], (1, C), jnp.float32),
    }


if __name__ == "__main__":
    # size_arg='small' -> [embed_dim, 512, 256]; small test: embed_dim=256, N=64, n_classes=2.
    N, E, H, D, C = 64, 256, 512, 256, 2
    key = jax.random.PRNGKey(0)
    k_h, k_p = jax.random.split(key)
    h = jax.random.normal(k_h, (N, E), jnp.float32)
    params = init_params(k_p, E, H, D, C)

    logits, Y_prob, Y_hat, A_raw = clam_mb_forward(h, params)
    logits = jax.block_until_ready(logits)

    r_logits, r_prob, r_yhat, r_araw = reference_forward(h, params)
    r_logits = jax.block_until_ready(r_logits)

    np.testing.assert_allclose(np.asarray(logits), np.asarray(r_logits), rtol=2e-2, atol=2e-2)
    np.testing.assert_allclose(np.asarray(Y_prob), np.asarray(r_prob), rtol=2e-2, atol=2e-2)
    np.testing.assert_allclose(np.asarray(A_raw), np.asarray(r_araw), rtol=2e-2, atol=2e-2)
    # Only assert argmax when the reference margin is comfortably above numeric noise.
    margin = abs(float(r_logits[0, 0] - r_logits[0, 1]))
    if margin > 1e-3:
        assert int(Y_hat[0, 0]) == int(r_yhat[0, 0])

    print("KERNEL_OK")
</pallas_src>

<mosaic_0001>
module attributes {stable_mosaic.version = 11 : i64} {
  func.func @clam_mb_kernel(%arg0: i32, %arg1: memref<64x256xbf16, #tpu.memory_space<vmem>>, %arg2: memref<256x512xbf16, #tpu.memory_space<vmem>>, %arg3: memref<1x512xf32, #tpu.memory_space<vmem>>, %arg4: memref<512x256xbf16, #tpu.memory_space<vmem>>, %arg5: memref<1x256xf32, #tpu.memory_space<vmem>>, %arg6: memref<512x256xbf16, #tpu.memory_space<vmem>>, %arg7: memref<1x256xf32, #tpu.memory_space<vmem>>, %arg8: memref<2x256xf32, #tpu.memory_space<vmem>>, %arg9: memref<1x2xf32, #tpu.memory_space<vmem>>, %arg10: memref<2x512xf32, #tpu.memory_space<vmem>>, %arg11: memref<1x2xf32, #tpu.memory_space<vmem>>, %arg12: memref<1x2xf32, #tpu.memory_space<vmem>>, %arg13: memref<64x2xf32, #tpu.memory_space<vmem>>) attributes {dimension_semantics = [#tpu.dimension_semantics<arbitrary>], iteration_bounds = array<i64: 1>, scalar_prefetch = 0 : i64, scratch_operands = 0 : i64, tpu.core_type = #tpu.core_type<tc>, window_params = [{pipeline_mode = #tpu.pipeline_mode<synchronous>, transform_indices = @transform_0, window_bounds = array<i64: 64, 256>}, {pipeline_mode = #tpu.pipeline_mode<synchronous>, transform_indices = @transform_1, window_bounds = array<i64: 256, 512>}, {pipeline_mode = #tpu.pipeline_mode<synchronous>, transform_indices = @transform_2, window_bounds = array<i64: 1, 512>}, {pipeline_mode = #tpu.pipeline_mode<synchronous>, transform_indices = @transform_3, window_bounds = array<i64: 512, 256>}, {pipeline_mode = #tpu.pipeline_mode<synchronous>, transform_indices = @transform_4, window_bounds = array<i64: 1, 256>}, {pipeline_mode = #tpu.pipeline_mode<synchronous>, transform_indices = @transform_5, window_bounds = array<i64: 512, 256>}, {pipeline_mode = #tpu.pipeline_mode<synchronous>, transform_indices = @transform_6, window_bounds = array<i64: 1, 256>}, {pipeline_mode = #tpu.pipeline_mode<synchronous>, transform_indices = @transform_7, window_bounds = array<i64: 2, 256>}, {pipeline_mode = #tpu.pipeline_mode<synchronous>, transform_indices = @transform_8, window_bounds = array<i64: 1, 2>}, {pipeline_mode = #tpu.pipeline_mode<synchronous>, transform_indices = @transform_9, window_bounds = array<i64: 2, 512>}, {pipeline_mode = #tpu.pipeline_mode<synchronous>, transform_indices = @transform_10, window_bounds = array<i64: 1, 2>}, {pipeline_mode = #tpu.pipeline_mode<synchronous>, transform_indices = @transform_11, window_bounds = array<i64: 1, 2>}, {pipeline_mode = #tpu.pipeline_mode<synchronous>, transform_indices = @transform_12, window_bounds = array<i64: 64, 2>}]} {
    %c0 = arith.constant 0 : index
    %c0_0 = arith.constant 0 : index
    %0 = vector.load %arg1[%c0, %c0_0] : memref<64x256xbf16, #tpu.memory_space<vmem>>, vector<64x256xbf16>
    %c0_1 = arith.constant 0 : index
    %c0_2 = arith.constant 0 : index
    %1 = vector.load %arg2[%c0_1, %c0_2] : memref<256x512xbf16, #tpu.memory_space<vmem>>, vector<256x512xbf16>
    %cst = arith.constant dense<0.000000e+00> : vector<64x512xf32>
    %2 = tpu.matmul %0, %1, %cst {dimension_numbers = #tpu.dot_dimension_numbers<[1], [0], [0], [1], [0, 0, 1, 1], [], []>} : vector<64x256xbf16>, vector<256x512xbf16>, vector<64x512xf32> -> vector<64x512xf32>
    %c0_3 = arith.constant 0 : index
    %c0_4 = arith.constant 0 : index
    %3 = vector.load %arg3[%c0_3, %c0_4] : memref<1x512xf32, #tpu.memory_space<vmem>>, vector<1x512xf32>
    %4 = vector.broadcast %3 : vector<1x512xf32> to vector<64x512xf32>
    %5 = arith.addf %2, %4 : vector<64x512xf32>
    %cst_5 = arith.constant 0.000000e+00 : f32
    %6 = vector.broadcast %cst_5 : f32 to vector<64x512xf32>
    %7 = arith.maximumf %5, %6 : vector<64x512xf32>
    %8 = arith.truncf %7 : vector<64x512xf32> to vector<64x512xbf16>
    %c0_6 = arith.constant 0 : index
    %c0_7 = arith.constant 0 : index
    %9 = vector.load %arg4[%c0_6, %c0_7] : memref<512x256xbf16, #tpu.memory_space<vmem>>, vector<512x256xbf16>
    %cst_8 = arith.constant dense<0.000000e+00> : vector<64x256xf32>
    %10 = tpu.matmul %8, %9, %cst_8 {dimension_numbers = #tpu.dot_dimension_numbers<[1], [0], [0], [1], [0, 0, 1, 1], [], []>} : vector<64x512xbf16>, vector<512x256xbf16>, vector<64x256xf32> -> vector<64x256xf32>
    %c0_9 = arith.constant 0 : index
    %c0_10 = arith.constant 0 : index
    %11 = vector.load %arg5[%c0_9, %c0_10] : memref<1x256xf32, #tpu.memory_space<vmem>>, vector<1x256xf32>
    %12 = vector.broadcast %11 : vector<1x256xf32> to vector<64x256xf32>
    %13 = arith.addf %10, %12 : vector<64x256xf32>
    %14 = math.tanh %13 : vector<64x256xf32>
    %c0_11 = arith.constant 0 : index
    %c0_12 = arith.constant 0 : index
    %15 = vector.load %arg6[%c0_11, %c0_12] : memref<512x256xbf16, #tpu.memory_space<vmem>>, vector<512x256xbf16>
    %cst_13 = arith.constant dense<0.000000e+00> : vector<64x256xf32>
    %16 = tpu.matmul %8, %15, %cst_13 {dimension_numbers = #tpu.dot_dimension_numbers<[1], [0], [0], [1], [0, 0, 1, 1], [], []>} : vector<64x512xbf16>, vector<512x256xbf16>, vector<64x256xf32> -> vector<64x256xf32>
    %c0_14 = arith.constant 0 : index
    %c0_15 = arith.constant 0 : index
    %17 = vector.load %arg7[%c0_14, %c0_15] : memref<1x256xf32, #tpu.memory_space<vmem>>, vector<1x256xf32>
    %18 = vector.broadcast %17 : vector<1x256xf32> to vector<64x256xf32>
    %19 = arith.addf %16, %18 : vector<64x256xf32>
    %20 = arith.negf %19 : vector<64x256xf32>
    %21 = math.exp %20 : vector<64x256xf32>
    %cst_16 = arith.constant 1.000000e+00 : f32
    %22 = vector.broadcast %cst_16 : f32 to vector<64x256xf32>
    %23 = arith.addf %22, %21 : vector<64x256xf32>
    %24 = arith.divf %22, %23 : vector<64x256xf32>
    %25 = arith.mulf %14, %24 : vector<64x256xf32>
    %c0_17 = arith.constant 0 : index
    %c0_18 = arith.constant 0 : index
    %26 = vector.load %arg8[%c0_17, %c0_18] : memref<2x256xf32, #tpu.memory_space<vmem>>, vector<1x256xf32>
    %27 = vector.broadcast %26 : vector<1x256xf32> to vector<64x256xf32>
    %28 = arith.mulf %25, %27 : vector<64x256xf32>
    %cst_19 = arith.constant dense<0.000000e+00> : vector<64xf32>
    %29 = vector.multi_reduction <add>, %28, %cst_19 [1] : vector<64x256xf32> to vector<64xf32>
    %30 = vector.shape_cast %29 : vector<64xf32> to vector<64x1xf32>
    %c0_20 = arith.constant 0 : index
    %c0_21 = arith.constant 0 : index
    %31 = vector.load %arg9[%c0_20, %c0_21] : memref<1x2xf32, #tpu.memory_space<vmem>>, vector<1x1xf32>
    %32 = vector.broadcast %31 : vector<1x1xf32> to vector<64x1xf32>
    %33 = arith.addf %30, %32 : vector<64x1xf32>
    %c0_22 = arith.constant 0 : index
    %c0_23 = arith.constant 0 : index
    %34 = vector.load %arg13[%c0_22, %c0_23] : memref<64x2xf32, #tpu.memory_space<vmem>>, vector<64x1xf32>
    tpu.vector_store %arg13[%c0_22, %c0_23], %33 {strides = array<i32>} : memref<64x2xf32, #tpu.memory_space<vmem>>, vector<64x1xf32>,
    %cst_24 = arith.constant dense<0xFF800000> : vector<1xf32>
    %35 = vector.multi_reduction <maximumf>, %33, %cst_24 [0] : vector<64x1xf32> to vector<1xf32>
    %36 = vector.shape_cast %35 : vector<1xf32> to vector<1x1xf32>
    %37 = vector.broadcast %36 : vector<1x1xf32> to vector<64x1xf32>
    %38 = arith.subf %33, %37 : vector<64x1xf32>
    %39 = math.exp %38 : vector<64x1xf32>
    %cst_25 = arith.constant dense<0.000000e+00> : vector<1xf32>
    %40 = vector.multi_reduction <add>, %39, %cst_25 [0] : vector<64x1xf32> to vector<1xf32>
    %41 = vector.shape_cast %40 : vector<1xf32> to vector<1x1xf32>
    %42 = tpu.reciprocal %41 {approx = true} : vector<1x1xf32> -> vector<1x1xf32>
    %43 = vector.broadcast %42 : vector<1x1xf32> to vector<64x1xf32>
    %44 = arith.mulf %39, %43 : vector<64x1xf32>
    %45 = vector.broadcast %44 : vector<64x1xf32> to vector<64x512xf32>
    %46 = arith.mulf %45, %7 : vector<64x512xf32>
    %cst_26 = arith.constant dense<0.000000e+00> : vector<512xf32>
    %47 = vector.multi_reduction <add>, %46, %cst_26 [0] : vector<64x512xf32> to vector<512xf32>
    %48 = vector.shape_cast %47 : vector<512xf32> to vector<1x512xf32>
    %c0_27 = arith.constant 0 : index
    %c0_28 = arith.constant 0 : index
    %49 = vector.load %arg10[%c0_27, %c0_28] : memref<2x512xf32, #tpu.memory_space<vmem>>, vector<1x512xf32>
    %50 = arith.mulf %48, %49 : vector<1x512xf32>
    %cst_29 = arith.constant dense<0.000000e+00> : vector<1xf32>
    %51 = vector.multi_reduction <add>, %50, %cst_29 [1] : vector<1x512xf32> to vector<1xf32>
    %52 = vector.shape_cast %51 : vector<1xf32> to vector<1x1xf32>
    %c0_30 = arith.constant 0 : index
    %c0_31 = arith.constant 0 : index
    %53 = vector.load %arg11[%c0_30, %c0_31] : memref<1x2xf32, #tpu.memory_space<vmem>>, vector<1x1xf32>
    %54 = arith.addf %52, %53 : vector<1x1xf32>
    %c0_32 = arith.constant 0 : index
    %c0_33 = arith.constant 0 : index
    %55 = vector.load %arg12[%c0_32, %c0_33] : memref<1x2xf32, #tpu.memory_space<vmem>>, vector<1x1xf32>
    tpu.vector_store %arg12[%c0_32, %c0_33], %54 {strides = array<i32>} : memref<1x2xf32, #tpu.memory_space<vmem>>, vector<1x1xf32>,
    %c1 = arith.constant 1 : index
    %c0_34 = arith.constant 0 : index
    %56 = vector.load %arg8[%c1, %c0_34] : memref<2x256xf32, #tpu.memory_space<vmem>>, vector<1x256xf32>
    %57 = vector.broadcast %56 : vector<1x256xf32> to vector<64x256xf32>
    %58 = arith.mulf %25, %57 : vector<64x256xf32>
    %cst_35 = arith.constant dense<0.000000e+00> : vector<64xf32>
    %59 = vector.multi_reduction <add>, %58, %cst_35 [1] : vector<64x256xf32> to vector<64xf32>
    %60 = vector.shape_cast %59 : vector<64xf32> to vector<64x1xf32>
    %c0_36 = arith.constant 0 : index
    %c1_37 = arith.constant 1 : index
    %61 = vector.load %arg9[%c0_36, %c1_37] : memref<1x2xf32, #tpu.memory_space<vmem>>, vector<1x1xf32>
    %62 = vector.broadcast %61 : vector<1x1xf32> to vector<64x1xf32>
    %63 = arith.addf %60, %62 : vector<64x1xf32>
    %c0_38 = arith.constant 0 : index
    %c1_39 = arith.constant 1 : index
    %64 = vector.load %arg13[%c0_38, %c1_39] : memref<64x2xf32, #tpu.memory_space<vmem>>, vector<64x1xf32>
    tpu.vector_store %arg13[%c0_38, %c1_39], %63 {strides = array<i32>} : memref<64x2xf32, #tpu.memory_space<vmem>>, vector<64x1xf32>,
    %cst_40 = arith.constant dense<0xFF800000> : vector<1xf32>
    %65 = vector.multi_reduction <maximumf>, %63, %cst_40 [0] : vector<64x1xf32> to vector<1xf32>
    %66 = vector.shape_cast %65 : vector<1xf32> to vector<1x1xf32>
    %67 = vector.broadcast %66 : vector<1x1xf32> to vector<64x1xf32>
    %68 = arith.subf %63, %67 : vector<64x1xf32>
    %69 = math.exp %68 : vector<64x1xf32>
    %cst_41 = arith.constant dense<0.000000e+00> : vector<1xf32>
    %70 = vector.multi_reduction <add>, %69, %cst_41 [0] : vector<64x1xf32> to vector<1xf32>
    %71 = vector.shape_cast %70 : vector<1xf32> to vector<1x1xf32>
    %72 = tpu.reciprocal %71 {approx = true} : vector<1x1xf32> -> vector<1x1xf32>
    %73 = vector.broadcast %72 : vector<1x1xf32> to vector<64x1xf32>
    %74 = arith.mulf %69, %73 : vector<64x1xf32>
    %75 = vector.broadcast %74 : vector<64x1xf32> to vector<64x512xf32>
    %76 = arith.mulf %75, %7 : vector<64x512xf32>
    %cst_42 = arith.constant dense<0.000000e+00> : vector<512xf32>
    %77 = vector.multi_reduction <add>, %76, %cst_42 [0] : vector<64x512xf32> to vector<512xf32>
    %78 = vector.shape_cast %77 : vector<512xf32> to vector<1x512xf32>
    %c1_43 = arith.constant 1 : index
    %c0_44 = arith.constant 0 : index
    %79 = vector.load %arg10[%c1_43, %c0_44] : memref<2x512xf32, #tpu.memory_space<vmem>>, vector<1x512xf32>
    %80 = arith.mulf %78, %79 : vector<1x512xf32>
    %cst_45 = arith.constant dense<0.000000e+00> : vector<1xf32>
    %81 = vector.multi_reduction <add>, %80, %cst_45 [1] : vector<1x512xf32> to vector<1xf32>
    %82 = vector.shape_cast %81 : vector<1xf32> to vector<1x1xf32>
    %c0_46 = arith.constant 0 : index
    %c1_47 = arith.constant 1 : index
    %83 = vector.load %arg11[%c0_46, %c1_47] : memref<1x2xf32, #tpu.memory_space<vmem>>, vector<1x1xf32>
    %84 = arith.addf %82, %83 : vector<1x1xf32>
    %c0_48 = arith.constant 0 : index
    %c1_49 = arith.constant 1 : index
    %85 = vector.load %arg12[%c0_48, %c1_49] : memref<1x2xf32, #tpu.memory_space<vmem>>, vector<1x1xf32>
    tpu.vector_store %arg12[%c0_48, %c1_49], %84 {strides = array<i32>} : memref<1x2xf32, #tpu.memory_space<vmem>>, vector<1x1xf32>,
    return
  }
  func.func @transform_0(%arg0: i32) -> (i32, i32) {
    %c0_i32 = arith.constant 0 : i32
    %c0_i32_0 = arith.constant 0 : i32
    %c0_i32_1 = arith.constant 0 : i32
    return %c0_i32, %c0_i32_0 : i32, i32
  }
  func.func @transform_1(%arg0: i32) -> (i32, i32) {
    %c0_i32 = arith.constant 0 : i32
    %c0_i32_0 = arith.constant 0 : i32
    %c0_i32_1 = arith.constant 0 : i32
    return %c0_i32, %c0_i32_0 : i32, i32
  }
  func.func @transform_2(%arg0: i32) -> (i32, i32) {
    %c0_i32 = arith.constant 0 : i32
    %c0_i32_0 = arith.constant 0 : i32
    %c0_i32_1 = arith.constant 0 : i32
    return %c0_i32, %c0_i32_0 : i32, i32
  }
  func.func @transform_3(%arg0: i32) -> (i32, i32) {
    %c0_i32 = arith.constant 0 : i32
    %c0_i32_0 = arith.constant 0 : i32
    %c0_i32_1 = arith.constant 0 : i32
    return %c0_i32, %c0_i32_0 : i32, i32
  }
  func.func @transform_4(%arg0: i32) -> (i32, i32) {
    %c0_i32 = arith.constant 0 : i32
    %c0_i32_0 = arith.constant 0 : i32
    %c0_i32_1 = arith.constant 0 : i32
    return %c0_i32, %c0_i32_0 : i32, i32
  }
  func.func @transform_5(%arg0: i32) -> (i32, i32) {
    %c0_i32 = arith.constant 0 : i32
    %c0_i32_0 = arith.constant 0 : i32
    %c0_i32_1 = arith.constant 0 : i32
    return %c0_i32, %c0_i32_0 : i32, i32
  }
  func.func @transform_6(%arg0: i32) -> (i32, i32) {
    %c0_i32 = arith.constant 0 : i32
    %c0_i32_0 = arith.constant 0 : i32
    %c0_i32_1 = arith.constant 0 : i32
    return %c0_i32, %c0_i32_0 : i32, i32
  }
  func.func @transform_7(%arg0: i32) -> (i32, i32) {
    %c0_i32 = arith.constant 0 : i32
    %c0_i32_0 = arith.constant 0 : i32
    %c0_i32_1 = arith.constant 0 : i32
    return %c0_i32, %c0_i32_0 : i32, i32
  }
  func.func @transform_8(%arg0: i32) -> (i32, i32) {
    %c0_i32 = arith.constant 0 : i32
    %c0_i32_0 = arith.constant 0 : i32
    %c0_i32_1 = arith.constant 0 : i32
    return %c0_i32, %c0_i32_0 : i32, i32
  }
  func.func @transform_9(%arg0: i32) -> (i32, i32) {
    %c0_i32 = arith.constant 0 : i32
    %c0_i32_0 = arith.constant 0 : i32
    %c0_i32_1 = arith.constant 0 : i32
    return %c0_i32, %c0_i32_0 : i32, i32
  }
  func.func @transform_10(%arg0: i32) -> (i32, i32) {
    %c0_i32 = arith.constant 0 : i32
    %c0_i32_0 = arith.constant 0 : i32
    %c0_i32_1 = arith.constant 0 : i32
    return %c0_i32, %c0_i32_0 : i32, i32
  }
  func.func @transform_11(%arg0: i32) -> (i32, i32) {
    %c0_i32 = arith.constant 0 : i32
    %c0_i32_0 = arith.constant 0 : i32
    %c0_i32_1 = arith.constant 0 : i32
    return %c0_i32, %c0_i32_0 : i32, i32
  }
  func.func @transform_12(%arg0: i32) -> (i32, i32) {
    %c0_i32 = arith.constant 0 : i32
    %c0_i32_0 = arith.constant 0 : i32
    %c0_i32_1 = arith.constant 0 : i32
    return %c0_i32, %c0_i32_0 : i32, i32
  }
}

</mosaic_0001>

<llo_original>
// kernel: tpu_custom_call.1
$region0: #{tpu_custom_call.1}
  #allocation0 [shape = 'u32[]', space=smem, size = 0x4, offset = 0x4, fixed_abs, tag = 'smem constant byte address 0x4 - core index']
  #allocation1 [shape = 'u32[144,128]{1,0:T(1,128)}', space=vmem, size = 0x12000, scoped, tag = 'internal scratch']
  %s0 = inlined_call_operand.hbm [shape: bf16[64,256], index: 0, kind: input, shape index: {}]
  %s1 = inlined_call_operand.hbm [shape: bf16[256,512], index: 1, kind: input, shape index: {}]
  %s2 = inlined_call_operand.vmem [shape: f32[1,512], index: 2, kind: input, shape index: {}]
  %s3 = inlined_call_operand.hbm [shape: bf16[512,256], index: 3, kind: input, shape index: {}]
  %s4 = inlined_call_operand.vmem [shape: f32[1,256], index: 4, kind: input, shape index: {}]
  %s5 = inlined_call_operand.hbm [shape: bf16[512,256], index: 5, kind: input, shape index: {}]
  %s6 = inlined_call_operand.vmem [shape: f32[1,256], index: 6, kind: input, shape index: {}]
  %s7 = inlined_call_operand.vmem [shape: f32[2,256], index: 7, kind: input, shape index: {}]
  %s8 = inlined_call_operand.vmem [shape: f32[1,2], index: 8, kind: input, shape index: {}]
  %s9 = inlined_call_operand.vmem [shape: f32[2,512], index: 9, kind: input, shape index: {}]
  %s10 = inlined_call_operand.vmem [shape: f32[1,2], index: 10, kind: input, shape index: {}]
  %s11 = inlined_call_operand.hbm [shape: f32[1,2], index: 11, kind: output, shape index: {0}]
  %s12 = inlined_call_operand.vmem [shape: f32[64,2], index: 12, kind: output, shape index: {1}]
  %13 = xla_tuple %s11, %s12
  %s14 = sld [smem:[#allocation0]]
  $region78: #{tpu_custom_call.1} parent=0
    _
  %s16 = ssub.s32 1, %s14
  %s17 = scalar_select 0, %s16, %s14
  $region1: #{tpu_custom_call.1} parent=0
    #allocation2 [shape = 'u8[32768]{0}', space=vmem, size = 0x8000, scoped, tag = 'input window, operand 0, single buffered']
    #allocation3 [shape = 's32[1]{0}', space=sflag, size = 0x4, scoped, tag = 'scoped memory for tpu_custom_call.1']
    #allocation4 [shape = 's32[1]{0}', space=sflag, size = 0x4, scoped, tag = 'scoped memory for tpu_custom_call.1']
    #allocation5 [shape = 'u8[262144]{0}', space=vmem, size = 0x40000, scoped, tag = 'input window, operand 1, single buffered']
    #allocation6 [shape = 's32[1]{0}', space=sflag, size = 0x4, scoped, tag = 'scoped memory for tpu_custom_call.1']
    #allocation7 [shape = 'u8[262144]{0}', space=vmem, size = 0x40000, scoped, tag = 'input window, operand 3, single buffered']
    #allocation8 [shape = 'u8[262144]{0}', space=vmem, size = 0x40000, scoped, tag = 'input window, operand 5, single buffered']
    #allocation9 [shape = 's32[1]{0}', space=sflag, size = 0x4, scoped, tag = 'scoped memory for tpu_custom_call.1']
    #allocation10 [shape = 'u8[512]{0}', space=vmem, size = 0x400, scoped, tag = 'output window, operand 0, single buffered']
    %18 = vsyncpa [#allocation3], 0
    %19 = vsyncpa [#allocation6], 0
    %20 = vsyncpa [#allocation9], 0
    %21 = vsyncpa [#allocation4], 0
    // Predicated region
    $region2: #{tpu_custom_call.1} parent=1 // pred_check
      _
    $region3: #{tpu_custom_call.1} parent=1 // pred_check_branch
      %23 = sbr.rel (0) target = $region5
    $region4: #{tpu_custom_call.1} parent=1 // pred_region
      %s25 = ssub.s32 1024, 1024
      %26 = vsyncadd [#allocation3], %s25
      %s27 = sshll.u32 [#allocation2], 4
      %s28 = int_to_ptr.vmem [resolvable:$true] %s27
      %33 = dma.hbm_to_vmem [thread:$0]  %s0, 1024, %s28, [#allocation3], 128, 128, 8
    $region5: #{tpu_custom_call.1} parent=1 // pred_fallthru
      _
    // Predicated region
    $region6: #{tpu_custom_call.1} parent=1 // pred_check
      _
    $region7: #{tpu_custom_call.1} parent=1 // pred_check_branch
      %35 = sbr.rel (0) target = $region9
    $region8: #{tpu_custom_call.1} parent=1 // pred_region
      %s37 = ssub.s32 8192, 8192
      %38 = vsyncadd [#allocation6], %s37
      %s39 = sshll.u32 [#allocation5], 4
      %s40 = int_to_ptr.vmem [resolvable:$true] %s39
      %45 = dma.hbm_to_vmem [thread:$0]  %s1, 8192, %s40, [#allocation6], 256, 256, 16
    $region9: #{tpu_custom_call.1} parent=1 // pred_fallthru
      _
    // Predicated region
    $region10: #{tpu_custom_call.1} parent=1 // pred_check
      _
    $region11: #{tpu_custom_call.1} parent=1 // pred_check_branch
      %47 = sbr.rel (0) target = $region13
    $region12: #{tpu_custom_call.1} parent=1 // pred_region
      _
    $region13: #{tpu_custom_call.1} parent=1 // pred_fallthru
      _
    // Predicated region
    $region14: #{tpu_custom_call.1} parent=1 // pred_check
      _
    $region15: #{tpu_custom_call.1} parent=1 // pred_check_branch
      %49 = sbr.rel (0) target = $region17
    $region16: #{tpu_custom_call.1} parent=1 // pred_region
      %s51 = ssub.s32 8192, 8192
      %52 = vsyncadd [#allocation6], %s51
      %s53 = sshll.u32 [#allocation7], 4
      %s54 = int_to_ptr.vmem [resolvable:$true] %s53
      %59 = dma.hbm_to_vmem [thread:$0]  %s3, 8192, %s54, [#allocation6], 128, 128, 8
    $region17: #{tpu_custom_call.1} parent=1 // pred_fallthru
      _
    // Predicated region
    $region18: #{tpu_custom_call.1} parent=1 // pred_check
      _
    $region19: #{tpu_custom_call.1} parent=1 // pred_check_branch
      %61 = sbr.rel (0) target = $region21
    $region20: #{tpu_custom_call.1} parent=1 // pred_region
      _
    $region21: #{tpu_custom_call.1} parent=1 // pred_fallthru
      _
    // Predicated region
    $region22: #{tpu_custom_call.1} parent=1 // pred_check
      _
    $region23: #{tpu_custom_call.1} parent=1 // pred_check_branch
      %63 = sbr.rel (0) target = $region25
    $region24: #{tpu_custom_call.1} parent=1 // pred_region
      %s65 = ssub.s32 8192, 8192
      %66 = vsyncadd [#allocation9], %s65
      %s67 = sshll.u32 [#allocation8], 4
      %s68 = int_to_ptr.vmem [resolvable:$true] %s67
      %73 = dma.hbm_to_vmem [thread:$0]  %s5, 8192, %s68, [#allocation9], 128, 128, 8
    $region25: #{tpu_custom_call.1} parent=1 // pred_fallthru
      _
    // Predicated region
    $region26: #{tpu_custom_call.1} parent=1 // pred_check
      _
    $region27: #{tpu_custom_call.1} parent=1 // pred_check_branch
      %75 = sbr.rel (0) target = $region29
    $region28: #{tpu_custom_call.1} parent=1 // pred_region
      _
    $region29: #{tpu_custom_call.1} parent=1 // pred_fallthru
      _
    // Predicated region
    $region30: #{tpu_custom_call.1} parent=1 // pred_check
      _
    $region31: #{tpu_custom_call.1} parent=1 // pred_check_branch
      %77 = sbr.rel (0) target = $region33
    $region32: #{tpu_custom_call.1} parent=1 // pred_region
      _
    $region33: #{tpu_custom_call.1} parent=1 // pred_fallthru
      _
    // Predicated region
    $region34: #{tpu_custom_call.1} parent=1 // pred_check
      _
    $region35: #{tpu_custom_call.1} parent=1 // pred_check_branch
      %79 = sbr.rel (0) target = $region37
    $region36: #{tpu_custom_call.1} parent=1 // pred_region
      _
    $region37: #{tpu_custom_call.1} parent=1 // pred_fallthru
      _
    // Predicated region
    $region38: #{tpu_custom_call.1} parent=1 // pred_check
      _
    $region39: #{tpu_custom_call.1} parent=1 // pred_check_branch
      %81 = sbr.rel (0) target = $region41
    $region40: #{tpu_custom_call.1} parent=1 // pred_region
      _
    $region41: #{tpu_custom_call.1} parent=1 // pred_fallthru
      _
    // Predicated region
    $region42: #{tpu_custom_call.1} parent=1 // pred_check
      _
    $region43: #{tpu_custom_call.1} parent=1 // pred_check_branch
      %83 = sbr.rel (0) target = $region45
    $region44: #{tpu_custom_call.1} parent=1 // pred_region
      _
    $region45: #{tpu_custom_call.1} parent=1 // pred_fallthru
      _
    // Predicated region
    $region46: #{tpu_custom_call.1} parent=1 // pred_check
      _
    $region47: #{tpu_custom_call.1} parent=1 // pred_check_branch
      %85 = sbr.rel (0) target = $region49
    $region48: #{tpu_custom_call.1} parent=1 // pred_region
      %86 = dma.done [#allocation3], 1024
    $region49: #{tpu_custom_call.1} parent=1 // pred_fallthru
      _
    // Predicated region
    $region50: #{tpu_custom_call.1} parent=1 // pred_check
      _
    $region51: #{tpu_custom_call.1} parent=1 // pred_check_branch
      %88 = sbr.rel (0) target = $region53
    $region52: #{tpu_custom_call.1} parent=1 // pred_region
      %89 = dma.done [#allocation6], 8192
    $region53: #{tpu_custom_call.1} parent=1 // pred_fallthru
      _
    // Predicated region
    $region54: #{tpu_custom_call.1} parent=1 // pred_check
      _
    $region55: #{tpu_custom_call.1} parent=1 // pred_check_branch
      %91 = sbr.rel (0) target = $region57
    $region56: #{tpu_custom_call.1} parent=1 // pred_region
      %92 = dma.done [#allocation6], 8192
    $region57: #{tpu_custom_call.1} parent=1 // pred_fallthru
      _
    // Predicated region
    $region58: #{tpu_custom_call.1} parent=1 // pred_check
      _
    $region59: #{tpu_custom_call.1} parent=1 // pred_check_branch
      %94 = sbr.rel (0) target = $region61
    $region60: #{tpu_custom_call.1} parent=1 // pred_region
      %95 = dma.done [#allocation9], 8192
    $region61: #{tpu_custom_call.1} parent=1 // pred_fallthru
      _
    %v96 = vld [vmem:[#allocation2] sm:$0xff]
    %v97 = vld [vmem:[#allocation2 + $0x8] sm:$0xff]
    %v98 = vld [vmem:[#allocation2 + $0x10] sm:$0xff]
    %v99 = vld [vmem:[#allocation2 + $0x18] sm:$0xff]
    %v100 = vld [vmem:[#allocation2 + $0x20] sm:$0xff]
    %v101 = vld [vmem:[#allocation2 + $0x28] sm:$0xff]
    %v102 = vld [vmem:[#allocation2 + $0x30] sm:$0xff]
    %v103 = vld [vmem:[#allocation2 + $0x38] sm:$0xff]
    %v104 = vld [vmem:[#allocation5] sm:$0xff]
    %v105 = vld [vmem:[#allocation5 + $0x8] sm:$0xff]
    %v106 = vld [vmem:[#allocation5 + $0x10] sm:$0xff]
    %v107 = vld [vmem:[#allocation5 + $0x18] sm:$0xff]
    %v108 = vld [vmem:[#allocation5 + $0x20] sm:$0xff]
    %v109 = vld [vmem:[#allocation5 + $0x28] sm:$0xff]
    %v110 = vld [vmem:[#allocation5 + $0x30] sm:$0xff]
    %v111 = vld [vmem:[#allocation5 + $0x38] sm:$0xff]
    %v112 = vld [vmem:[#allocation5 + $0x40] sm:$0xff]
    %v113 = vld [vmem:[#allocation5 + $0x48] sm:$0xff]
    %v114 = vld [vmem:[#allocation5 + $0x50] sm:$0xff]
    %v115 = vld [vmem:[#allocation5 + $0x58] sm:$0xff]
    %v116 = vld [vmem:[#allocation5 + $0x60] sm:$0xff]
    %v117 = vld [vmem:[#allocation5 + $0x68] sm:$0xff]
    %v118 = vld [vmem:[#allocation5 + $0x70] sm:$0xff]
    %v119 = vld [vmem:[#allocation5 + $0x78] sm:$0xff]
    %v120 = vld [vmem:[#allocation5 + $0x80] sm:$0xff]
    %v121 = vld [vmem:[#allocation5 + $0x88] sm:$0xff]
    %v122 = vld [vmem:[#allocation5 + $0x90] sm:$0xff]
    %v123 = vld [vmem:[#allocation5 + $0x98] sm:$0xff]
    %v124 = vld [vmem:[#allocation5 + $0xa0] sm:$0xff]
    %v125 = vld [vmem:[#allocation5 + $0xa8] sm:$0xff]
    %v126 = vld [vmem:[#allocation5 + $0xb0] sm:$0xff]
    %v127 = vld [vmem:[#allocation5 + $0xb8] sm:$0xff]
    %v128 = vld [vmem:[#allocation5 + $0xc0] sm:$0xff]
    %v129 = vld [vmem:[#allocation5 + $0xc8] sm:$0xff]
    %v130 = vld [vmem:[#allocation5 + $0xd0] sm:$0xff]
    %v131 = vld [vmem:[#allocation5 + $0xd8] sm:$0xff]
    %v132 = vld [vmem:[#allocation5 + $0xe0] sm:$0xff]
    %v133 = vld [vmem:[#allocation5 + $0xe8] sm:$0xff]
    %v134 = vld [vmem:[#allocation5 + $0xf0] sm:$0xff]
    %v135 = vld [vmem:[#allocation5 + $0xf8] sm:$0xff]
    %v136 = vld [vmem:[#allocation5 + $0x100] sm:$0xff]
    %v137 = vld [vmem:[#allocation5 + $0x108] sm:$0xff]
    %v138 = vld [vmem:[#allocation5 + $0x110] sm:$0xff]
    %v139 = vld [vmem:[#allocation5 + $0x118] sm:$0xff]
    %v140 = vld [vmem:[#allocation5 + $0x120] sm:$0xff]
    %v141 = vld [vmem:[#allocation5 + $0x128] sm:$0xff]
    %v142 = vld [vmem:[#allocation5 + $0x130] sm:$0xff]
    %v143 = vld [vmem:[#allocation5 + $0x138] sm:$0xff]
    %v144 = vld [vmem:[#allocation5 + $0x140] sm:$0xff]
    %v145 = vld [vmem:[#allocation5 + $0x148] sm:$0xff]
    %v146 = vld [vmem:[#allocation5 + $0x150] sm:$0xff]
    %v147 = vld [vmem:[#allocation5 + $0x158] sm:$0xff]
    %v148 = vld [vmem:[#allocation5 + $0x160] sm:$0xff]
    %v149 = vld [vmem:[#allocation5 + $0x168] sm:$0xff]
    %v150 = vld [vmem:[#allocation5 + $0x170] sm:$0xff]
    %v151 = vld [vmem:[#allocation5 + $0x178] sm:$0xff]
    %v152 = vld [vmem:[#allocation5 + $0x180] sm:$0xff]
    %v153 = vld [vmem:[#allocation5 + $0x188] sm:$0xff]
    %v154 = vld [vmem:[#allocation5 + $0x190] sm:$0xff]
    %v155 = vld [vmem:[#allocation5 + $0x198] sm:$0xff]
    %v156 = vld [vmem:[#allocation5 + $0x1a0] sm:$0xff]
    %v157 = vld [vmem:[#allocation5 + $0x1a8] sm:$0xff]
    %v158 = vld [vmem:[#allocation5 + $0x1b0] sm:$0xff]
    %v159 = vld [vmem:[#allocation5 + $0x1b8] sm:$0xff]
    %v160 = vld [vmem:[#allocation5 + $0x1c0] sm:$0xff]
    %v161 = vld [vmem:[#allocation5 + $0x1c8] sm:$0xff]
    %v162 = vld [vmem:[#allocation5 + $0x1d0] sm:$0xff]
    %v163 = vld [vmem:[#allocation5 + $0x1d8] sm:$0xff]
    %v164 = vld [vmem:[#allocation5 + $0x1e0] sm:$0xff]
    %v165 = vld [vmem:[#allocation5 + $0x1e8] sm:$0xff]
    %v166 = vld [vmem:[#allocation5 + $0x1f0] sm:$0xff]
    %v167 = vld [vmem:[#allocation5 + $0x1f8] sm:$0xff]
    %v168 = vld [vmem:[%s2] sm:$0xf]
    %v170 = vlaneseq
    %v171 = vshrl.u32 %v170, 7
    %v172 = vsub.s32 0, %v171
    %v173 = vrot.slane %v168, %v172
    %v174 = vlaneseq
    %v175 = vshrl.u32 %v174, 7
    %v176 = vsub.s32 1, %v175
    %v177 = vrot.slane %v168, %v176
    %v178 = vlaneseq
    %v179 = vshrl.u32 %v178, 7
    %v180 = vsub.s32 2, %v179
    %v181 = vrot.slane %v168, %v180
    %v182 = vlaneseq
    %v183 = vshrl.u32 %v182, 7
    %v184 = vsub.s32 3, %v183
    %v185 = vrot.slane %v168, %v184
    %v198 = vunpack.c.l.b16 %v96
    %v199 = vunpack.c.h.b16 %v96
    %v200 = vunpack.c.l.b16 %v97
    %v201 = vunpack.c.h.b16 %v97
    %v202 = vunpack.c.l.b16 %v98
    %v203 = vunpack.c.h.b16 %v98
    %v204 = vunpack.c.l.b16 %v99
    %v205 = vunpack.c.h.b16 %v99
    %v206 = vunpack.c.l.b16 %v100
    %v207 = vunpack.c.h.b16 %v100
    %v208 = vunpack.c.l.b16 %v101
    %v209 = vunpack.c.h.b16 %v101
    %v210 = vunpack.c.l.b16 %v102
    %v211 = vunpack.c.h.b16 %v102
    %v212 = vunpack.c.l.b16 %v103
    %v213 = vunpack.c.h.b16 %v103
    %v214 = vpack.c.b16 %v200, %v198
    %v215 = vpack.c.b16 %v201, %v199
    %v216 = vpack.c.b16 %v204, %v202
    %v217 = vpack.c.b16 %v205, %v203
    %v218 = vpack.c.b16 %v208, %v206
    %v219 = vpack.c.b16 %v209, %v207
    %v220 = vpack.c.b16 %v212, %v210
    %v221 = vpack.c.b16 %v213, %v211
    %v294 = vunpack.c.l.b16 %v104
    %v295 = vunpack.c.h.b16 %v104
    %v296 = vunpack.c.l.b16 %v105
    %v297 = vunpack.c.h.b16 %v105
    %v298 = vunpack.c.l.b16 %v106
    %v299 = vunpack.c.h.b16 %v106
    %v300 = vunpack.c.l.b16 %v107
    %v301 = vunpack.c.h.b16 %v107
    %v302 = vunpack.c.l.b16 %v108
    %v303 = vunpack.c.h.b16 %v108
    %v304 = vunpack.c.l.b16 %v109
    %v305 = vunpack.c.h.b16 %v109
    %v306 = vunpack.c.l.b16 %v110
    %v307 = vunpack.c.h.b16 %v110
    %v308 = vunpack.c.l.b16 %v111
    %v309 = vunpack.c.h.b16 %v111
    %v310 = vunpack.c.l.b16 %v112
    %v311 = vunpack.c.h.b16 %v112
    %v312 = vunpack.c.l.b16 %v113
    %v313 = vunpack.c.h.b16 %v113
    %v314 = vunpack.c.l.b16 %v114
    %v315 = vunpack.c.h.b16 %v114
    %v316 = vunpack.c.l.b16 %v115
    %v317 = vunpack.c.h.b16 %v115
    %v318 = vunpack.c.l.b16 %v116
    %v319 = vunpack.c.h.b16 %v116
    %v320 = vunpack.c.l.b16 %v117
    %v321 = vunpack.c.h.b16 %v117
    %v322 = vunpack.c.l.b16 %v118
    %v323 = vunpack.c.h.b16 %v118
    %v324 = vunpack.c.l.b16 %v119
    %v325 = vunpack.c.h.b16 %v119
    %v326 = vunpack.c.l.b16 %v120
    %v327 = vunpack.c.h.b16 %v120
    %v328 = vunpack.c.l.b16 %v121
    %v329 = vunpack.c.h.b16 %v121
    %v330 = vunpack.c.l.b16 %v122
    %v331 = vunpack.c.h.b16 %v122
    %v332 = vunpack.c.l.b16 %v123
    %v333 = vunpack.c.h.b16 %v123
    %v334 = vunpack.c.l.b16 %v124
    %v335 = vunpack.c.h.b16 %v124
    %v336 = vunpack.c.l.b16 %v125
    %v337 = vunpack.c.h.b16 %v125
    %v338 = vunpack.c.l.b16 %v126
    %v339 = vunpack.c.h.b16 %v126
    %v340 = vunpack.c.l.b16 %v127
    %v341 = vunpack.c.h.b16 %v127
    %v342 = vunpack.c.l.b16 %v128
    %v343 = vunpack.c.h.b16 %v128
    %v344 = vunpack.c.l.b16 %v129
    %v345 = vunpack.c.h.b16 %v129
    %v346 = vunpack.c.l.b16 %v130
    %v347 = vunpack.c.h.b16 %v130
    %v348 = vunpack.c.l.b16 %v131
    %v349 = vunpack.c.h.b16 %v131
    %v350 = vunpack.c.l.b16 %v132
    %v351 = vunpack.c.h.b16 %v132
    %v352 = vunpack.c.l.b16 %v133
    %v353 = vunpack.c.h.b16 %v133
    %v354 = vunpack.c.l.b16 %v134
    %v355 = vunpack.c.h.b16 %v134
    %v356 = vunpack.c.l.b16 %v135
    %v357 = vunpack.c.h.b16 %v135
    %v358 = vunpack.c.l.b16 %v136
    %v359 = vunpack.c.h.b16 %v136
    %v360 = vunpack.c.l.b16 %v137
    %v361 = vunpack.c.h.b16 %v137
    %v362 = vunpack.c.l.b16 %v138
    %v363 = vunpack.c.h.b16 %v138
    %v364 = vunpack.c.l.b16 %v139
    %v365 = vunpack.c.h.b16 %v139
    %v366 = vunpack.c.l.b16 %v140
    %v367 = vunpack.c.h.b16 %v140
    %v368 = vunpack.c.l.b16 %v141
    %v369 = vunpack.c.h.b16 %v141
    %v370 = vunpack.c.l.b16 %v142
    %v371 = vunpack.c.h.b16 %v142
    %v372 = vunpack.c.l.b16 %v143
    %v373 = vunpack.c.h.b16 %v143
    %v374 = vunpack.c.l.b16 %v144
    %v375 = vunpack.c.h.b16 %v144
    %v376 = vunpack.c.l.b16 %v145
    %v377 = vunpack.c.h.b16 %v145
    %v378 = vunpack.c.l.b16 %v146
    %v379 = vunpack.c.h.b16 %v146
    %v380 = vunpack.c.l.b16 %v147
    %v381 = vunpack.c.h.b16 %v147
    %v382 = vunpack.c.l.b16 %v148
    %v383 = vunpack.c.h.b16 %v148
    %v384 = vunpack.c.l.b16 %v149
    %v385 = vunpack.c.h.b16 %v149
    %v386 = vunpack.c.l.b16 %v150
    %v387 = vunpack.c.h.b16 %v150
    %v388 = vunpack.c.l.b16 %v151
    %v389 = vunpack.c.h.b16 %v151
    %v390 = vunpack.c.l.b16 %v152
    %v391 = vunpack.c.h.b16 %v152
    %v392 = vunpack.c.l.b16 %v153
    %v393 = vunpack.c.h.b16 %v153
    %v394 = vunpack.c.l.b16 %v154
    %v395 = vunpack.c.h.b16 %v154
    %v396 = vunpack.c.l.b16 %v155
    %v397 = vunpack.c.h.b16 %v155
    %v398 = vunpack.c.l.b16 %v156
    %v399 = vunpack.c.h.b16 %v156
    %v400 = vunpack.c.l.b16 %v157
    %v401 = vunpack.c.h.b16 %v157
    %v402 = vunpack.c.l.b16 %v158
    %v403 = vunpack.c.h.b16 %v158
    %v404 = vunpack.c.l.b16 %v159
    %v405 = vunpack.c.h.b16 %v159
    %v406 = vunpack.c.l.b16 %v160
    %v407 = vunpack.c.h.b16 %v160
    %v408 = vunpack.c.l.b16 %v161
    %v409 = vunpack.c.h.b16 %v161
    %v410 = vunpack.c.l.b16 %v162
    %v411 = vunpack.c.h.b16 %v162
    %v412 = vunpack.c.l.b16 %v163
    %v413 = vunpack.c.h.b16 %v163
    %v414 = vunpack.c.l.b16 %v164
    %v415 = vunpack.c.h.b16 %v164
    %v416 = vunpack.c.l.b16 %v165
    %v417 = vunpack.c.h.b16 %v165
    %v418 = vunpack.c.l.b16 %v166
    %v419 = vunpack.c.h.b16 %v166
    %v420 = vunpack.c.l.b16 %v167
    %v421 = vunpack.c.h.b16 %v167
    %v422 = vpack.c.b16 %v298, %v294
    %v423 = vpack.c.b16 %v299, %v295
    %v424 = vpack.c.b16 %v300, %v296
    %v425 = vpack.c.b16 %v301, %v297
    %v426 = vpack.c.b16 %v306, %v302
    %v427 = vpack.c.b16 %v307, %v303
    %v428 = vpack.c.b16 %v308, %v304
    %v429 = vpack.c.b16 %v309, %v305
    %v430 = vpack.c.b16 %v314, %v310
    %v431 = vpack.c.b16 %v315, %v311
    %v432 = vpack.c.b16 %v316, %v312
    %v433 = vpack.c.b16 %v317, %v313
    %v434 = vpack.c.b16 %v322, %v318
    %v435 = vpack.c.b16 %v323, %v319
    %v436 = vpack.c.b16 %v324, %v320
    %v437 = vpack.c.b16 %v325, %v321
    %v438 = vpack.c.b16 %v330, %v326
    %v439 = vpack.c.b16 %v331, %v327
    %v440 = vpack.c.b16 %v332, %v328
    %v441 = vpack.c.b16 %v333, %v329
    %v442 = vpack.c.b16 %v338, %v334
    %v443 = vpack.c.b16 %v339, %v335
    %v444 = vpack.c.b16 %v340, %v336
    %v445 = vpack.c.b16 %v341, %v337
    %v446 = vpack.c.b16 %v346, %v342
    %v447 = vpack.c.b16 %v347, %v343
    %v448 = vpack.c.b16 %v348, %v344
    %v449 = vpack.c.b16 %v349, %v345
    %v450 = vpack.c.b16 %v354, %v350
    %v451 = vpack.c.b16 %v355, %v351
    %v452 = vpack.c.b16 %v356, %v352
    %v453 = vpack.c.b16 %v357, %v353
    %v454 = vpack.c.b16 %v362, %v358
    %v455 = vpack.c.b16 %v363, %v359
    %v456 = vpack.c.b16 %v364, %v360
    %v457 = vpack.c.b16 %v365, %v361
    %v458 = vpack.c.b16 %v370, %v366
    %v459 = vpack.c.b16 %v371, %v367
    %v460 = vpack.c.b16 %v372, %v368
    %v461 = vpack.c.b16 %v373, %v369
    %v462 = vpack.c.b16 %v378, %v374
    %v463 = vpack.c.b16 %v379, %v375
    %v464 = vpack.c.b16 %v380, %v376
    %v465 = vpack.c.b16 %v381, %v377
    %v466 = vpack.c.b16 %v386, %v382
    %v467 = vpack.c.b16 %v387, %v383
    %v468 = vpack.c.b16 %v388, %v384
    %v469 = vpack.c.b16 %v389, %v385
    %v470 = vpack.c.b16 %v394, %v390
    %v471 = vpack.c.b16 %v395, %v391
    %v472 = vpack.c.b16 %v396, %v392
    %v473 = vpack.c.b16 %v397, %v393
    %v474 = vpack.c.b16 %v402, %v398
    %v475 = vpack.c.b16 %v403, %v399
    %v476 = vpack.c.b16 %v404, %v400
    %v477 = vpack.c.b16 %v405, %v401
    %v478 = vpack.c.b16 %v410, %v406
    %v479 = vpack.c.b16 %v411, %v407
    %v480 = vpack.c.b16 %v412, %v408
    %v481 = vpack.c.b16 %v413, %v409
    %v482 = vpack.c.b16 %v418, %v414
    %v483 = vpack.c.b16 %v419, %v415
    %v484 = vpack.c.b16 %v420, %v416
    %v485 = vpack.c.b16 %v421, %v417
    %550 = vmatprep.subr.bf16.mxu0 %v423
    %551 = vmatpush1.bf16.msra.mxu0 %v422
    %552 = vmatprep.subr.bf16.mxu0 %v427
    %553 = vmatpush1.bf16.msra.mxu0 %v426
    %554 = vmatprep.subr.bf16.mxu0 %v431
    %555 = vmatpush1.bf16.msra.mxu0 %v430
    %556 = vmatprep.subr.bf16.mxu0 %v435
    %557 = vmatpush1.bf16.msra.mxu0 %v434
    %558 = vmatprep.subr.bf16.mxu0 %v439
    %559 = vmatpush1.bf16.msra.mxu0 %v438
    %560 = vmatprep.subr.bf16.mxu0 %v443
    %561 = vmatpush1.bf16.msra.mxu0 %v442
    %562 = vmatprep.subr.bf16.mxu0 %v447
    %563 = vmatpush1.bf16.msra.mxu0 %v446
    %564 = vmatprep.subr.bf16.mxu0 %v451
    %565 = vmatpush1.bf16.msra.mxu0 %v450
    %566 = vmatprep.subr.bf16.mxu0 %v455
    %567 = vmatpush1.bf16.msra.mxu0 %v454
    %568 = vmatprep.subr.bf16.mxu0 %v459
    %569 = vmatpush1.bf16.msra.mxu0 %v458
    %570 = vmatprep.subr.bf16.mxu0 %v463
    %571 = vmatpush1.bf16.msra.mxu0 %v462
    %572 = vmatprep.subr.bf16.mxu0 %v467
    %573 = vmatpush1.bf16.msra.mxu0 %v466
    %574 = vmatprep.subr.bf16.mxu0 %v471
    %575 = vmatpush1.bf16.msra.mxu0 %v470
    %576 = vmatprep.subr.bf16.mxu0 %v475
    %577 = vmatpush1.bf16.msra.mxu0 %v474
    %578 = vmatprep.subr.bf16.mxu0 %v479
    %579 = vmatpush1.bf16.msra.mxu0 %v478
    %580 = vmatprep.subr.bf16.mxu0 %v483
    %581 = vmatpush1.bf16.msra.mxu0 %v482
    %582 = vmatprep.mubr.bf16.mxu0 %v215
    %583 = vmatmul.mubr.bf16.gmra.mrb[0].mxu0 %v214
    %v584 = vpop.f32.mrb[0].mxu0
    %v585 = vadd.f32 %v173, %v584
    %v586 = vpop.f32.mrb[0].mxu0
    %v587 = vadd.f32 %v177, %v586
    %v588 = vpop.f32.mrb[0].mxu0
    %v589 = vadd.f32 %v173, %v588
    %v590 = vpop.f32.mrb[0].mxu0
    %v591 = vadd.f32 %v177, %v590
    %592 = vmatprep.mubr.bf16.mxu0 %v217
    %593 = vmatmul.mubr.bf16.gmra.mrb[0].mxu0 %v216
    %v594 = vpop.f32.mrb[0].mxu0
    %v595 = vadd.f32 %v173, %v594
    %v596 = vpop.f32.mrb[0].mxu0
    %v597 = vadd.f32 %v177, %v596
    %v598 = vpop.f32.mrb[0].mxu0
    %v599 = vadd.f32 %v173, %v598
    %v600 = vpop.f32.mrb[0].mxu0
    %v601 = vadd.f32 %v177, %v600
    %602 = vmatprep.mubr.bf16.mxu0 %v219
    %603 = vmatmul.mubr.bf16.gmra.mrb[0].mxu0 %v218
    %v604 = vpop.f32.mrb[0].mxu0
    %v605 = vadd.f32 %v173, %v604
    %v606 = vpop.f32.mrb[0].mxu0
    %v607 = vadd.f32 %v177, %v606
    %v608 = vpop.f32.mrb[0].mxu0
    %v609 = vadd.f32 %v173, %v608
    %v610 = vpop.f32.mrb[0].mxu0
    %v611 = vadd.f32 %v177, %v610
    %612 = vmatprep.mubr.bf16.mxu0 %v221
    %613 = vmatmul.mubr.bf16.gmra.mrb[0].mxu0 %v220
    %v614 = vpop.f32.mrb[0].mxu0
    %v615 = vadd.f32 %v173, %v614
    %v616 = vpop.f32.mrb[0].mxu0
    %v617 = vadd.f32 %v177, %v616
    %v618 = vpop.f32.mrb[0].mxu0
    %v619 = vadd.f32 %v173, %v618
    %v620 = vpop.f32.mrb[0].mxu0
    %v621 = vadd.f32 %v177, %v620
    %622 = vdwg.mxu0
    %623 = vmatprep.subr.bf16.mxu0 %v425
    %624 = vmatpush1.bf16.msra.mxu0 %v424
    %625 = vmatprep.subr.bf16.mxu0 %v429
    %626 = vmatpush1.bf16.msra.mxu0 %v428
    %627 = vmatprep.subr.bf16.mxu0 %v433
    %628 = vmatpush1.bf16.msra.mxu0 %v432
    %629 = vmatprep.subr.bf16.mxu0 %v437
    %630 = vmatpush1.bf16.msra.mxu0 %v436
    %631 = vmatprep.subr.bf16.mxu0 %v441
    %632 = vmatpush1.bf16.msra.mxu0 %v440
    %633 = vmatprep.subr.bf16.mxu0 %v445
    %634 = vmatpush1.bf16.msra.mxu0 %v444
    %635 = vmatprep.subr.bf16.mxu0 %v449
    %636 = vmatpush1.bf16.msra.mxu0 %v448
    %637 = vmatprep.subr.bf16.mxu0 %v453
    %638 = vmatpush1.bf16.msra.mxu0 %v452
    %639 = vmatprep.subr.bf16.mxu0 %v457
    %640 = vmatpush1.bf16.msra.mxu0 %v456
    %641 = vmatprep.subr.bf16.mxu0 %v461
    %642 = vmatpush1.bf16.msra.mxu0 %v460
    %643 = vmatprep.subr.bf16.mxu0 %v465
    %644 = vmatpush1.bf16.msra.mxu0 %v464
    %645 = vmatprep.subr.bf16.mxu0 %v469
    %646 = vmatpush1.bf16.msra.mxu0 %v468
    %647 = vmatprep.subr.bf16.mxu0 %v473
    %648 = vmatpush1.bf16.msra.mxu0 %v472
    %649 = vmatprep.subr.bf16.mxu0 %v477
    %650 = vmatpush1.bf16.msra.mxu0 %v476
    %651 = vmatprep.subr.bf16.mxu0 %v481
    %652 = vmatpush1.bf16.msra.mxu0 %v480
    %653 = vmatprep.subr.bf16.mxu0 %v485
    %654 = vmatpush1.bf16.msra.mxu0 %v484
    %655 = vmatprep.mubr.bf16.mxu0 %v215
    %656 = vmatmul.mubr.bf16.gmra.mrb[0].mxu0 %v214
    %v657 = vpop.f32.mrb[0].mxu0
    %v658 = vadd.f32 %v181, %v657
    %v659 = vpop.f32.mrb[0].mxu0
    %v660 = vadd.f32 %v185, %v659
    %v661 = vpop.f32.mrb[0].mxu0
    %v662 = vadd.f32 %v181, %v661
    %v663 = vpop.f32.mrb[0].mxu0
    %v664 = vadd.f32 %v185, %v663
    %665 = vmatprep.mubr.bf16.mxu0 %v217
    %666 = vmatmul.mubr.bf16.gmra.mrb[0].mxu0 %v216
    %v667 = vpop.f32.mrb[0].mxu0
    %v668 = vadd.f32 %v181, %v667
    %v669 = vpop.f32.mrb[0].mxu0
    %v670 = vadd.f32 %v185, %v669
    %v671 = vpop.f32.mrb[0].mxu0
    %v672 = vadd.f32 %v181, %v671
    %v673 = vpop.f32.mrb[0].mxu0
    %v674 = vadd.f32 %v185, %v673
    %675 = vmatprep.mubr.bf16.mxu0 %v219
    %676 = vmatmul.mubr.bf16.gmra.mrb[0].mxu0 %v218
    %v677 = vpop.f32.mrb[0].mxu0
    %v678 = vadd.f32 %v181, %v677
    %v679 = vpop.f32.mrb[0].mxu0
    %v680 = vadd.f32 %v185, %v679
    %v681 = vpop.f32.mrb[0].mxu0
    %v682 = vadd.f32 %v181, %v681
    %v683 = vpop.f32.mrb[0].mxu0
    %v684 = vadd.f32 %v185, %v683
    %685 = vmatprep.mubr.bf16.mxu0 %v221
    %686 = vmatmul.mubr.bf16.gmra.mrb[0].mxu0 %v220
    %v687 = vpop.f32.mrb[0].mxu0
    %v688 = vadd.f32 %v181, %v687
    %v689 = vpop.f32.mrb[0].mxu0
    %v690 = vadd.f32 %v185, %v689
    %v691 = vpop.f32.mrb[0].mxu0
    %v692 = vadd.f32 %v181, %v691
    %v693 = vpop.f32.mrb[0].mxu0
    %v694 = vadd.f32 %v185, %v693
    %695 = vdwg.mxu0
    %v696 = vmax.f32 %v585, 0.0
    %v697 = vmax.f32 %v587, 0.0
    %v698 = vmax.f32 %v658, 0.0
    %v699 = vmax.f32 %v660, 0.0
    %v700 = vmax.f32 %v589, 0.0
    %v701 = vmax.f32 %v591, 0.0
    %v702 = vmax.f32 %v662, 0.0
    %v703 = vmax.f32 %v664, 0.0
    %v704 = vmax.f32 %v595, 0.0
    %v705 = vmax.f32 %v597, 0.0
    %v706 = vmax.f32 %v668, 0.0
    %v707 = vmax.f32 %v670, 0.0
    %v708 = vmax.f32 %v599, 0.0
    %v709 = vmax.f32 %v601, 0.0
    %v710 = vmax.f32 %v672, 0.0
    %v711 = vmax.f32 %v674, 0.0
    %v712 = vmax.f32 %v605, 0.0
    %v713 = vmax.f32 %v607, 0.0
    %v714 = vmax.f32 %v678, 0.0
    %v715 = vmax.f32 %v680, 0.0
    %v716 = vmax.f32 %v609, 0.0
    %v717 = vmax.f32 %v611, 0.0
    %v718 = vmax.f32 %v682, 0.0
    %v719 = vmax.f32 %v684, 0.0
    %v720 = vmax.f32 %v615, 0.0
    %v721 = vmax.f32 %v617, 0.0
    %v722 = vmax.f32 %v688, 0.0
    %v723 = vmax.f32 %v690, 0.0
    %v724 = vmax.f32 %v619, 0.0
    %v725 = vmax.f32 %v621, 0.0
    %v726 = vmax.f32 %v692, 0.0
    %v727 = vmax.f32 %v694, 0.0
    %v728 = vpack.c.bf16 %v700, %v696
    %v729 = vpack.c.bf16 %v701, %v697
    %v730 = vpack.c.bf16 %v702, %v698
    %v731 = vpack.c.bf16 %v703, %v699
    %v732 = vpack.c.bf16 %v708, %v704
    %v733 = vpack.c.bf16 %v709, %v705
    %v734 = vpack.c.bf16 %v710, %v706
    %v735 = vpack.c.bf16 %v711, %v707
    %v736 = vpack.c.bf16 %v716, %v712
    %v737 = vpack.c.bf16 %v717, %v713
    %v738 = vpack.c.bf16 %v718, %v714
    %v739 = vpack.c.bf16 %v719, %v715
    %v740 = vpack.c.bf16 %v724, %v720
    %v741 = vpack.c.bf16 %v725, %v721
    %v742 = vpack.c.bf16 %v726, %v722
    %v743 = vpack.c.bf16 %v727, %v723
    %v744 = vld [vmem:[#allocation7] sm:$0xff]
    %v745 = vld [vmem:[#allocation7 + $0x8] sm:$0xff]
    %v746 = vld [vmem:[#allocation7 + $0x10] sm:$0xff]
    %v747 = vld [vmem:[#allocation7 + $0x18] sm:$0xff]
    %v748 = vld [vmem:[#allocation7 + $0x20] sm:$0xff]
    %v749 = vld [vmem:[#allocation7 + $0x28] sm:$0xff]
    %v750 = vld [vmem:[#allocation7 + $0x30] sm:$0xff]
    %v751 = vld [vmem:[#allocation7 + $0x38] sm:$0xff]
    %v752 = vld [vmem:[#allocation7 + $0x40] sm:$0xff]
    %v753 = vld [vmem:[#allocation7 + $0x48] sm:$0xff]
    %v754 = vld [vmem:[#allocation7 + $0x50] sm:$0xff]
    %v755 = vld [vmem:[#allocation7 + $0x58] sm:$0xff]
    %v756 = vld [vmem:[#allocation7 + $0x60] sm:$0xff]
    %v757 = vld [vmem:[#allocation7 + $0x68] sm:$0xff]
    %v758 = vld [vmem:[#allocation7 + $0x70] sm:$0xff]
    %v759 = vld [vmem:[#allocation7 + $0x78] sm:$0xff]
    %v760 = vld [vmem:[#allocation7 + $0x80] sm:$0xff]
    %v761 = vld [vmem:[#allocation7 + $0x88] sm:$0xff]
    %v762 = vld [vmem:[#allocation7 + $0x90] sm:$0xff]
    %v763 = vld [vmem:[#allocation7 + $0x98] sm:$0xff]
    %v764 = vld [vmem:[#allocation7 + $0xa0] sm:$0xff]
    %v765 = vld [vmem:[#allocation7 + $0xa8] sm:$0xff]
    %v766 = vld [vmem:[#allocation7 + $0xb0] sm:$0xff]
    %v767 = vld [vmem:[#allocation7 + $0xb8] sm:$0xff]
    %v768 = vld [vmem:[#allocation7 + $0xc0] sm:$0xff]
    %v769 = vld [vmem:[#allocation7 + $0xc8] sm:$0xff]
    %v770 = vld [vmem:[#allocation7 + $0xd0] sm:$0xff]
    %v771 = vld [vmem:[#allocation7 + $0xd8] sm:$0xff]
    %v772 = vld [vmem:[#allocation7 + $0xe0] sm:$0xff]
    %v773 = vld [vmem:[#allocation7 + $0xe8] sm:$0xff]
    %v774 = vld [vmem:[#allocation7 + $0xf0] sm:$0xff]
    %v775 = vld [vmem:[#allocation7 + $0xf8] sm:$0xff]
    %v776 = vld [vmem:[#allocation7 + $0x100] sm:$0xff]
    %v777 = vld [vmem:[#allocation7 + $0x108] sm:$0xff]
    %v778 = vld [vmem:[#allocation7 + $0x110] sm:$0xff]
    %v779 = vld [vmem:[#allocation7 + $0x118] sm:$0xff]
    %v780 = vld [vmem:[#allocation7 + $0x120] sm:$0xff]
    %v781 = vld [vmem:[#allocation7 + $0x128] sm:$0xff]
    %v782 = vld [vmem:[#allocation7 + $0x130] sm:$0xff]
    %v783 = vld [vmem:[#allocation7 + $0x138] sm:$0xff]
    %v784 = vld [vmem:[#allocation7 + $0x140] sm:$0xff]
    %v785 = vld [vmem:[#allocation7 + $0x148] sm:$0xff]
    %v786 = vld [vmem:[#allocation7 + $0x150] sm:$0xff]
    %v787 = vld [vmem:[#allocation7 + $0x158] sm:$0xff]
    %v788 = vld [vmem:[#allocation7 + $0x160] sm:$0xff]
    %v789 = vld [vmem:[#allocation7 + $0x168] sm:$0xff]
    %v790 = vld [vmem:[#allocation7 + $0x170] sm:$0xff]
    %v791 = vld [vmem:[#allocation7 + $0x178] sm:$0xff]
    %v792 = vld [vmem:[#allocation7 + $0x180] sm:$0xff]
    %v793 = vld [vmem:[#allocation7 + $0x188] sm:$0xff]
    %v794 = vld [vmem:[#allocation7 + $0x190] sm:$0xff]
    %v795 = vld [vmem:[#allocation7 + $0x198] sm:$0xff]
    %v796 = vld [vmem:[#allocation7 + $0x1a0] sm:$0xff]
    %v797 = vld [vmem:[#allocation7 + $0x1a8] sm:$0xff]
    %v798 = vld [vmem:[#allocation7 + $0x1b0] sm:$0xff]
    %v799 = vld [vmem:[#allocation7 + $0x1b8] sm:$0xff]
    %v800 = vld [vmem:[#allocation7 + $0x1c0] sm:$0xff]
    %v801 = vld [vmem:[#allocation7 + $0x1c8] sm:$0xff]
    %v802 = vld [vmem:[#allocation7 + $0x1d0] sm:$0xff]
    %v803 = vld [vmem:[#allocation7 + $0x1d8] sm:$0xff]
    %v804 = vld [vmem:[#allocation7 + $0x1e0] sm:$0xff]
    %v805 = vld [vmem:[#allocation7 + $0x1e8] sm:$0xff]
    %v806 = vld [vmem:[#allocation7 + $0x1f0] sm:$0xff]
    %v807 = vld [vmem:[#allocation7 + $0x1f8] sm:$0xff]
    %v808 = vld [vmem:[%s4] sm:$0x3]
    %v810 = vlaneseq
    %v811 = vshrl.u32 %v810, 7
    %v812 = vsub.s32 0, %v811
    %v813 = vrot.slane %v808, %v812
    %v814 = vlaneseq
    %v815 = vshrl.u32 %v814, 7
    %v816 = vsub.s32 1, %v815
    %v817 = vrot.slane %v808, %v816
    %v884 = vunpack.c.l.b16 %v744
    %v885 = vunpack.c.h.b16 %v744
    %v886 = vunpack.c.l.b16 %v745
    %v887 = vunpack.c.h.b16 %v745
    %v888 = vunpack.c.l.b16 %v746
    %v889 = vunpack.c.h.b16 %v746
    %v890 = vunpack.c.l.b16 %v747
    %v891 = vunpack.c.h.b16 %v747
    %v892 = vunpack.c.l.b16 %v748
    %v893 = vunpack.c.h.b16 %v748
    %v894 = vunpack.c.l.b16 %v749
    %v895 = vunpack.c.h.b16 %v749
    %v896 = vunpack.c.l.b16 %v750
    %v897 = vunpack.c.h.b16 %v750
    %v898 = vunpack.c.l.b16 %v751
    %v899 = vunpack.c.h.b16 %v751
    %v900 = vunpack.c.l.b16 %v752
    %v901 = vunpack.c.h.b16 %v752
    %v902 = vunpack.c.l.b16 %v753
    %v903 = vunpack.c.h.b16 %v753
    %v904 = vunpack.c.l.b16 %v754
    %v905 = vunpack.c.h.b16 %v754
    %v906 = vunpack.c.l.b16 %v755
    %v907 = vunpack.c.h.b16 %v755
    %v908 = vunpack.c.l.b16 %v756
    %v909 = vunpack.c.h.b16 %v756
    %v910 = vunpack.c.l.b16 %v757
    %v911 = vunpack.c.h.b16 %v757
    %v912 = vunpack.c.l.b16 %v758
    %v913 = vunpack.c.h.b16 %v758
    %v914 = vunpack.c.l.b16 %v759
    %v915 = vunpack.c.h.b16 %v759
    %v916 = vunpack.c.l.b16 %v760
    %v917 = vunpack.c.h.b16 %v760
    %v918 = vunpack.c.l.b16 %v761
    %v919 = vunpack.c.h.b16 %v761
    %v920 = vunpack.c.l.b16 %v762
    %v921 = vunpack.c.h.b16 %v762
    %v922 = vunpack.c.l.b16 %v763
    %v923 = vunpack.c.h.b16 %v763
    %v924 = vunpack.c.l.b16 %v764
    %v925 = vunpack.c.h.b16 %v764
    %v926 = vunpack.c.l.b16 %v765
    %v927 = vunpack.c.h.b16 %v765
    %v928 = vunpack.c.l.b16 %v766
    %v929 = vunpack.c.h.b16 %v766
    %v930 = vunpack.c.l.b16 %v767
    %v931 = vunpack.c.h.b16 %v767
    %v932 = vunpack.c.l.b16 %v768
    %v933 = vunpack.c.h.b16 %v768
    %v934 = vunpack.c.l.b16 %v769
    %v935 = vunpack.c.h.b16 %v769
    %v936 = vunpack.c.l.b16 %v770
    %v937 = vunpack.c.h.b16 %v770
    %v938 = vunpack.c.l.b16 %v771
    %v939 = vunpack.c.h.b16 %v771
    %v940 = vunpack.c.l.b16 %v772
    %v941 = vunpack.c.h.b16 %v772
    %v942 = vunpack.c.l.b16 %v773
    %v943 = vunpack.c.h.b16 %v773
    %v944 = vunpack.c.l.b16 %v774
    %v945 = vunpack.c.h.b16 %v774
    %v946 = vunpack.c.l.b16 %v775
    %v947 = vunpack.c.h.b16 %v775
    %v948 = vunpack.c.l.b16 %v776
    %v949 = vunpack.c.h.b16 %v776
    %v950 = vunpack.c.l.b16 %v777
    %v951 = vunpack.c.h.b16 %v777
    %v952 = vunpack.c.l.b16 %v778
    %v953 = vunpack.c.h.b16 %v778
    %v954 = vunpack.c.l.b16 %v779
    %v955 = vunpack.c.h.b16 %v779
    %v956 = vunpack.c.l.b16 %v780
    %v957 = vunpack.c.h.b16 %v780
    %v958 = vunpack.c.l.b16 %v781
    %v959 = vunpack.c.h.b16 %v781
    %v960 = vunpack.c.l.b16 %v782
    %v961 = vunpack.c.h.b16 %v782
    %v962 = vunpack.c.l.b16 %v783
    %v963 = vunpack.c.h.b16 %v783
    %v964 = vunpack.c.l.b16 %v784
    %v965 = vunpack.c.h.b16 %v784
    %v966 = vunpack.c.l.b16 %v785
    %v967 = vunpack.c.h.b16 %v785
    %v968 = vunpack.c.l.b16 %v786
    %v969 = vunpack.c.h.b16 %v786
    %v970 = vunpack.c.l.b16 %v787
    %v971 = vunpack.c.h.b16 %v787
    %v972 = vunpack.c.l.b16 %v788
    %v973 = vunpack.c.h.b16 %v788
    %v974 = vunpack.c.l.b16 %v789
    %v975 = vunpack.c.h.b16 %v789
    %v976 = vunpack.c.l.b16 %v790
    %v977 = vunpack.c.h.b16 %v790
    %v978 = vunpack.c.l.b16 %v791
    %v979 = vunpack.c.h.b16 %v791
    %v980 = vunpack.c.l.b16 %v792
    %v981 = vunpack.c.h.b16 %v792
    %v982 = vunpack.c.l.b16 %v793
    %v983 = vunpack.c.h.b16 %v793
    %v984 = vunpack.c.l.b16 %v794
    %v985 = vunpack.c.h.b16 %v794
    %v986 = vunpack.c.l.b16 %v795
    %v987 = vunpack.c.h.b16 %v795
    %v988 = vunpack.c.l.b16 %v796
    %v989 = vunpack.c.h.b16 %v796
    %v990 = vunpack.c.l.b16 %v797
    %v991 = vunpack.c.h.b16 %v797
    %v992 = vunpack.c.l.b16 %v798
    %v993 = vunpack.c.h.b16 %v798
    %v994 = vunpack.c.l.b16 %v799
    %v995 = vunpack.c.h.b16 %v799
    %v996 = vunpack.c.l.b16 %v800
    %v997 = vunpack.c.h.b16 %v800
    %v998 = vunpack.c.l.b16 %v801
    %v999 = vunpack.c.h.b16 %v801
    %v1000 = vunpack.c.l.b16 %v802
    %v1001 = vunpack.c.h.b16 %v802
    %v1002 = vunpack.c.l.b16 %v803
    %v1003 = vunpack.c.h.b16 %v803
    %v1004 = vunpack.c.l.b16 %v804
    %v1005 = vunpack.c.h.b16 %v804
    %v1006 = vunpack.c.l.b16 %v805
    %v1007 = vunpack.c.h.b16 %v805
    %v1008 = vunpack.c.l.b16 %v806
    %v1009 = vunpack.c.h.b16 %v806
    %v1010 = vunpack.c.l.b16 %v807
    %v1011 = vunpack.c.h.b16 %v807
    %v1012 = vpack.c.b16 %v886, %v884
    %v1013 = vpack.c.b16 %v887, %v885
    %v1014 = vpack.c.b16 %v890, %v888
    %v1015 = vpack.c.b16 %v891, %v889
    %v1016 = vpack.c.b16 %v894, %v892
    %v1017 = vpack.c.b16 %v895, %v893
    %v1018 = vpack.c.b16 %v898, %v896
    %v1019 = vpack.c.b16 %v899, %v897
    %v1020 = vpack.c.b16 %v902, %v900
    %v1021 = vpack.c.b16 %v903, %v901
    %v1022 = vpack.c.b16 %v906, %v904
    %v1023 = vpack.c.b16 %v907, %v905
    %v1024 = vpack.c.b16 %v910, %v908
    %v1025 = vpack.c.b16 %v911, %v909
    %v1026 = vpack.c.b16 %v914, %v912
    %v1027 = vpack.c.b16 %v915, %v913
    %v1028 = vpack.c.b16 %v918, %v916
    %v1029 = vpack.c.b16 %v919, %v917
    %v1030 = vpack.c.b16 %v922, %v920
    %v1031 = vpack.c.b16 %v923, %v921
    %v1032 = vpack.c.b16 %v926, %v924
    %v1033 = vpack.c.b16 %v927, %v925
    %v1034 = vpack.c.b16 %v930, %v928
    %v1035 = vpack.c.b16 %v931, %v929
    %v1036 = vpack.c.b16 %v934, %v932
    %v1037 = vpack.c.b16 %v935, %v933
    %v1038 = vpack.c.b16 %v938, %v936
    %v1039 = vpack.c.b16 %v939, %v937
    %v1040 = vpack.c.b16 %v942, %v940
    %v1041 = vpack.c.b16 %v943, %v941
    %v1042 = vpack.c.b16 %v946, %v944
    %v1043 = vpack.c.b16 %v947, %v945
    %v1044 = vpack.c.b16 %v950, %v948
    %v1045 = vpack.c.b16 %v951, %v949
    %v1046 = vpack.c.b16 %v954, %v952
    %v1047 = vpack.c.b16 %v955, %v953
    %v1048 = vpack.c.b16 %v958, %v956
    %v1049 = vpack.c.b16 %v959, %v957
    %v1050 = vpack.c.b16 %v962, %v960
    %v1051 = vpack.c.b16 %v963, %v961
    %v1052 = vpack.c.b16 %v966, %v964
    %v1053 = vpack.c.b16 %v967, %v965
    %v1054 = vpack.c.b16 %v970, %v968
    %v1055 = vpack.c.b16 %v971, %v969
    %v1056 = vpack.c.b16 %v974, %v972
    %v1057 = vpack.c.b16 %v975, %v973
    %v1058 = vpack.c.b16 %v978, %v976
    %v1059 = vpack.c.b16 %v979, %v977
    %v1060 = vpack.c.b16 %v982, %v980
    %v1061 = vpack.c.b16 %v983, %v981
    %v1062 = vpack.c.b16 %v986, %v984
    %v1063 = vpack.c.b16 %v987, %v985
    %v1064 = vpack.c.b16 %v990, %v988
    %v1065 = vpack.c.b16 %v991, %v989
    %v1066 = vpack.c.b16 %v994, %v992
    %v1067 = vpack.c.b16 %v995, %v993
    %v1068 = vpack.c.b16 %v998, %v996
    %v1069 = vpack.c.b16 %v999, %v997
    %v1070 = vpack.c.b16 %v1002, %v1000
    %v1071 = vpack.c.b16 %v1003, %v1001
    %v1072 = vpack.c.b16 %v1006, %v1004
    %v1073 = vpack.c.b16 %v1007, %v1005
    %v1074 = vpack.c.b16 %v1010, %v1008
    %v1075 = vpack.c.b16 %v1011, %v1009
    %1140 = vmatprep.subr.bf16.mxu0 %v1013
    %1141 = vmatpush1.bf16.msra.mxu0 %v1012
    %1142 = vmatprep.subr.bf16.mxu0 %v1015
    %1143 = vmatpush1.bf16.msra.mxu0 %v1014
    %1144 = vmatprep.subr.bf16.mxu0 %v1017
    %1145 = vmatpush1.bf16.msra.mxu0 %v1016
    %1146 = vmatprep.subr.bf16.mxu0 %v1019
    %1147 = vmatpush1.bf16.msra.mxu0 %v1018
    %1148 = vmatprep.subr.bf16.mxu0 %v1021
    %1149 = vmatpush1.bf16.msra.mxu0 %v1020
    %1150 = vmatprep.subr.bf16.mxu0 %v1023
    %1151 = vmatpush1.bf16.msra.mxu0 %v1022
    %1152 = vmatprep.subr.bf16.mxu0 %v1025
    %1153 = vmatpush1.bf16.msra.mxu0 %v1024
    %1154 = vmatprep.subr.bf16.mxu0 %v1027
    %1155 = vmatpush1.bf16.msra.mxu0 %v1026
    %1156 = vmatprep.subr.bf16.mxu0 %v1029
    %1157 = vmatpush1.bf16.msra.mxu0 %v1028
    %1158 = vmatprep.subr.bf16.mxu0 %v1031
    %1159 = vmatpush1.bf16.msra.mxu0 %v1030
    %1160 = vmatprep.subr.bf16.mxu0 %v1033
    %1161 = vmatpush1.bf16.msra.mxu0 %v1032
    %1162 = vmatprep.subr.bf16.mxu0 %v1035
    %1163 = vmatpush1.bf16.msra.mxu0 %v1034
    %1164 = vmatprep.subr.bf16.mxu0 %v1037
    %1165 = vmatpush1.bf16.msra.mxu0 %v1036
    %1166 = vmatprep.subr.bf16.mxu0 %v1039
    %1167 = vmatpush1.bf16.msra.mxu0 %v1038
    %1168 = vmatprep.subr.bf16.mxu0 %v1041
    %1169 = vmatpush1.bf16.msra.mxu0 %v1040
    %1170 = vmatprep.subr.bf16.mxu0 %v1043
    %1171 = vmatpush1.bf16.msra.mxu0 %v1042
    %1172 = vmatprep.mubr.bf16.mxu0 %v729
    %1173 = vmatmul.mubr.bf16.gmra.mrb[0].mxu0 %v728
    %v1174 = vpop.f32.mrb[0].mxu0
    %v1175 = vadd.f32 %v813, %v1174
    %v1176 = vpop.f32.mrb[0].mxu0
    %v1177 = vadd.f32 %v817, %v1176
    %v1178 = vpop.f32.mrb[0].mxu0
    %v1179 = vadd.f32 %v813, %v1178
    %v1180 = vpop.f32.mrb[0].mxu0
    %v1181 = vadd.f32 %v817, %v1180
    %1182 = vmatprep.mubr.bf16.mxu0 %v733
    %1183 = vmatmul.mubr.bf16.gmra.mrb[0].mxu0 %v732
    %v1184 = vpop.f32.mrb[0].mxu0
    %v1185 = vadd.f32 %v813, %v1184
    %v1186 = vpop.f32.mrb[0].mxu0
    %v1187 = vadd.f32 %v817, %v1186
    %v1188 = vpop.f32.mrb[0].mxu0
    %v1189 = vadd.f32 %v813, %v1188
    %v1190 = vpop.f32.mrb[0].mxu0
    %v1191 = vadd.f32 %v817, %v1190
    %1192 = vmatprep.mubr.bf16.mxu0 %v737
    %1193 = vmatmul.mubr.bf16.gmra.mrb[0].mxu0 %v736
    %v1194 = vpop.f32.mrb[0].mxu0
    %v1195 = vadd.f32 %v813, %v1194
    %v1196 = vpop.f32.mrb[0].mxu0
    %v1197 = vadd.f32 %v817, %v1196
    %v1198 = vpop.f32.mrb[0].mxu0
    %v1199 = vadd.f32 %v813, %v1198
    %v1200 = vpop.f32.mrb[0].mxu0
    %v1201 = vadd.f32 %v817, %v1200
    %1202 = vmatprep.mubr.bf16.mxu0 %v741
    %1203 = vmatmul.mubr.bf16.gmra.mrb[0].mxu0 %v740
    %v1204 = vpop.f32.mrb[0].mxu0
    %v1205 = vadd.f32 %v813, %v1204
    %v1206 = vpop.f32.mrb[0].mxu0
    %v1207 = vadd.f32 %v817, %v1206
    %v1208 = vpop.f32.mrb[0].mxu0
    %v1209 = vadd.f32 %v813, %v1208
    %v1210 = vpop.f32.mrb[0].mxu0
    %v1211 = vadd.f32 %v817, %v1210
    %1212 = vdwg.mxu0
    %1213 = vmatprep.subr.bf16.mxu0 %v1045
    %1214 = vmatpush1.bf16.msra.mxu0 %v1044
    %1215 = vmatprep.subr.bf16.mxu0 %v1047
    %1216 = vmatpush1.bf16.msra.mxu0 %v1046
    %1217 = vmatprep.subr.bf16.mxu0 %v1049
    %1218 = vmatpush1.bf16.msra.mxu0 %v1048
    %1219 = vmatprep.subr.bf16.mxu0 %v1051
    %1220 = vmatpush1.bf16.msra.mxu0 %v1050
    %1221 = vmatprep.subr.bf16.mxu0 %v1053
    %1222 = vmatpush1.bf16.msra.mxu0 %v1052
    %1223 = vmatprep.subr.bf16.mxu0 %v1055
    %1224 = vmatpush1.bf16.msra.mxu0 %v1054
    %1225 = vmatprep.subr.bf16.mxu0 %v1057
    %1226 = vmatpush1.bf16.msra.mxu0 %v1056
    %1227 = vmatprep.subr.bf16.mxu0 %v1059
    %1228 = vmatpush1.bf16.msra.mxu0 %v1058
    %1229 = vmatprep.subr.bf16.mxu0 %v1061
    %1230 = vmatpush1.bf16.msra.mxu0 %v1060
    %1231 = vmatprep.subr.bf16.mxu0 %v1063
    %1232 = vmatpush1.bf16.msra.mxu0 %v1062
    %1233 = vmatprep.subr.bf16.mxu0 %v1065
    %1234 = vmatpush1.bf16.msra.mxu0 %v1064
    %1235 = vmatprep.subr.bf16.mxu0 %v1067
    %1236 = vmatpush1.bf16.msra.mxu0 %v1066
    %1237 = vmatprep.subr.bf16.mxu0 %v1069
    %1238 = vmatpush1.bf16.msra.mxu0 %v1068
    %1239 = vmatprep.subr.bf16.mxu0 %v1071
    %1240 = vmatpush1.bf16.msra.mxu0 %v1070
    %1241 = vmatprep.subr.bf16.mxu0 %v1073
    %1242 = vmatpush1.bf16.msra.mxu0 %v1072
    %1243 = vmatprep.subr.bf16.mxu0 %v1075
    %1244 = vmatpush1.bf16.msra.mxu0 %v1074
    %1245 = vmatprep.mubr.bf16.mxu0 %v731
    %1246 = vmatmul.mubr.bf16.gmra.mrb[0].mxu0 %v730
    %v1247 = vpop.f32.mrb[0].mxu0
    %v1248 = vadd.f32 %v1175, %v1247
    %v1249 = vpop.f32.mrb[0].mxu0
    %v1250 = vadd.f32 %v1177, %v1249
    %v1251 = vpop.f32.mrb[0].mxu0
    %v1252 = vadd.f32 %v1179, %v1251
    %v1253 = vpop.f32.mrb[0].mxu0
    %v1254 = vadd.f32 %v1181, %v1253
    %1255 = vmatprep.mubr.bf16.mxu0 %v735
    %1256 = vmatmul.mubr.bf16.gmra.mrb[0].mxu0 %v734
    %v1257 = vpop.f32.mrb[0].mxu0
    %v1258 = vadd.f32 %v1185, %v1257
    %v1259 = vpop.f32.mrb[0].mxu0
    %v1260 = vadd.f32 %v1187, %v1259
    %v1261 = vpop.f32.mrb[0].mxu0
    %v1262 = vadd.f32 %v1189, %v1261
    %v1263 = vpop.f32.mrb[0].mxu0
    %v1264 = vadd.f32 %v1191, %v1263
    %1265 = vmatprep.mubr.bf16.mxu0 %v739
    %1266 = vmatmul.mubr.bf16.gmra.mrb[0].mxu0 %v738
    %v1267 = vpop.f32.mrb[0].mxu0
    %v1268 = vadd.f32 %v1195, %v1267
    %v1269 = vpop.f32.mrb[0].mxu0
    %v1270 = vadd.f32 %v1197, %v1269
    %v1271 = vpop.f32.mrb[0].mxu0
    %v1272 = vadd.f32 %v1199, %v1271
    %v1273 = vpop.f32.mrb[0].mxu0
    %v1274 = vadd.f32 %v1201, %v1273
    %1275 = vmatprep.mubr.bf16.mxu0 %v743
    %1276 = vmatmul.mubr.bf16.gmra.mrb[0].mxu0 %v742
    %v1277 = vpop.f32.mrb[0].mxu0
    %v1278 = vadd.f32 %v1205, %v1277
    %v1279 = vpop.f32.mrb[0].mxu0
    %v1280 = vadd.f32 %v1207, %v1279
    %v1281 = vpop.f32.mrb[0].mxu0
    %v1282 = vadd.f32 %v1209, %v1281
    %v1283 = vpop.f32.mrb[0].mxu0
    %v1284 = vadd.f32 %v1211, %v1283
    %1285 = vdwg.mxu0
    %v1286 = vtanh.pop %v1248
    %v1287 = vtanh.pop %v1250
    %v1288 = vtanh.pop %v1252
    %v1289 = vtanh.pop %v1254
    %v1290 = vtanh.pop %v1258
    %v1291 = vtanh.pop %v1260
    %v1292 = vtanh.pop %v1262
    %v1293 = vtanh.pop %v1264
    %v1294 = vtanh.pop %v1268
    %v1295 = vtanh.pop %v1270
    %v1296 = vtanh.pop %v1272
    %v1297 = vtanh.pop %v1274
    %v1298 = vtanh.pop %v1278
    %v1299 = vtanh.pop %v1280
    %v1300 = vtanh.pop %v1282
    %v1301 = vtanh.pop %v1284
    %v1302 = vld [vmem:[#allocation8] sm:$0xff]
    %v1303 = vld [vmem:[#allocation8 + $0x8] sm:$0xff]
    %v1304 = vld [vmem:[#allocation8 + $0x10] sm:$0xff]
    %v1305 = vld [vmem:[#allocation8 + $0x18] sm:$0xff]
    %v1306 = vld [vmem:[#allocation8 + $0x20] sm:$0xff]
    %v1307 = vld [vmem:[#allocation8 + $0x28] sm:$0xff]
    %v1308 = vld [vmem:[#allocation8 + $0x30] sm:$0xff]
    %v1309 = vld [vmem:[#allocation8 + $0x38] sm:$0xff]
    %v1310 = vld [vmem:[#allocation8 + $0x40] sm:$0xff]
    %v1311 = vld [vmem:[#allocation8 + $0x48] sm:$0xff]
    %v1312 = vld [vmem:[#allocation8 + $0x50] sm:$0xff]
    %v1313 = vld [vmem:[#allocation8 + $0x58] sm:$0xff]
    %v1314 = vld [vmem:[#allocation8 + $0x60] sm:$0xff]
    %v1315 = vld [vmem:[#allocation8 + $0x68] sm:$0xff]
    %v1316 = vld [vmem:[#allocation8 + $0x70] sm:$0xff]
    %v1317 = vld [vmem:[#allocation8 + $0x78] sm:$0xff]
    %v1318 = vld [vmem:[#allocation8 + $0x80] sm:$0xff]
    %v1319 = vld [vmem:[#allocation8 + $0x88] sm:$0xff]
    %v1320 = vld [vmem:[#allocation8 + $0x90] sm:$0xff]
    %v1321 = vld [vmem:[#allocation8 + $0x98] sm:$0xff]
    %v1322 = vld [vmem:[#allocation8 + $0xa0] sm:$0xff]
    %v1323 = vld [vmem:[#allocation8 + $0xa8] sm:$0xff]
    %v1324 = vld [vmem:[#allocation8 + $0xb0] sm:$0xff]
    %v1325 = vld [vmem:[#allocation8 + $0xb8] sm:$0xff]
    %v1326 = vld [vmem:[#allocation8 + $0xc0] sm:$0xff]
    %v1327 = vld [vmem:[#allocation8 + $0xc8] sm:$0xff]
    %v1328 = vld [vmem:[#allocation8 + $0xd0] sm:$0xff]
    %v1329 = vld [vmem:[#allocation8 + $0xd8] sm:$0xff]
    %v1330 = vld [vmem:[#allocation8 + $0xe0] sm:$0xff]
    %v1331 = vld [vmem:[#allocation8 + $0xe8] sm:$0xff]
    %v1332 = vld [vmem:[#allocation8 + $0xf0] sm:$0xff]
    %v1333 = vld [vmem:[#allocation8 + $0xf8] sm:$0xff]
    %v1334 = vld [vmem:[#allocation8 + $0x100] sm:$0xff]
    %v1335 = vld [vmem:[#allocation8 + $0x108] sm:$0xff]
    %v1336 = vld [vmem:[#allocation8 + $0x110] sm:$0xff]
    %v1337 = vld [vmem:[#allocation8 + $0x118] sm:$0xff]
    %v1338 = vld [vmem:[#allocation8 + $0x120] sm:$0xff]
    %v1339 = vld [vmem:[#allocation8 + $0x128] sm:$0xff]
    %v1340 = vld [vmem:[#allocation8 + $0x130] sm:$0xff]
    %v1341 = vld [vmem:[#allocation8 + $0x138] sm:$0xff]
    %v1342 = vld [vmem:[#allocation8 + $0x140] sm:$0xff]
    %v1343 = vld [vmem:[#allocation8 + $0x148] sm:$0xff]
    %v1344 = vld [vmem:[#allocation8 + $0x150] sm:$0xff]
    %v1345 = vld [vmem:[#allocation8 + $0x158] sm:$0xff]
    %v1346 = vld [vmem:[#allocation8 + $0x160] sm:$0xff]
    %v1347 = vld [vmem:[#allocation8 + $0x168] sm:$0xff]
    %v1348 = vld [vmem:[#allocation8 + $0x170] sm:$0xff]
    %v1349 = vld [vmem:[#allocation8 + $0x178] sm:$0xff]
    %v1350 = vld [vmem:[#allocation8 + $0x180] sm:$0xff]
    %v1351 = vld [vmem:[#allocation8 + $0x188] sm:$0xff]
    %v1352 = vld [vmem:[#allocation8 + $0x190] sm:$0xff]
    %v1353 = vld [vmem:[#allocation8 + $0x198] sm:$0xff]
    %v1354 = vld [vmem:[#allocation8 + $0x1a0] sm:$0xff]
    %v1355 = vld [vmem:[#allocation8 + $0x1a8] sm:$0xff]
    %v1356 = vld [vmem:[#allocation8 + $0x1b0] sm:$0xff]
    %v1357 = vld [vmem:[#allocation8 + $0x1b8] sm:$0xff]
    %v1358 = vld [vmem:[#allocation8 + $0x1c0] sm:$0xff]
    %v1359 = vld [vmem:[#allocation8 + $0x1c8] sm:$0xff]
    %v1360 = vld [vmem:[#allocation8 + $0x1d0] sm:$0xff]
    %v1361 = vld [vmem:[#allocation8 + $0x1d8] sm:$0xff]
    %v1362 = vld [vmem:[#allocation8 + $0x1e0] sm:$0xff]
    %v1363 = vld [vmem:[#allocation8 + $0x1e8] sm:$0xff]
    %v1364 = vld [vmem:[#allocation8 + $0x1f0] sm:$0xff]
    %v1365 = vld [vmem:[#allocation8 + $0x1f8] sm:$0xff]
    %v1366 = vld [vmem:[%s6] sm:$0x3]
    %v1368 = vlaneseq
    %v1369 = vshrl.u32 %v1368, 7
    %v1370 = vsub.s32 0, %v1369
    %v1371 = vrot.slane %v1366, %v1370
    %v1372 = vlaneseq
    %v1373 = vshrl.u32 %v1372, 7
    %v1374 = vsub.s32 1, %v1373
    %v1375 = vrot.slane %v1366, %v1374
    %v1442 = vunpack.c.l.b16 %v1302
    %v1443 = vunpack.c.h.b16 %v1302
    %v1444 = vunpack.c.l.b16 %v1303
    %v1445 = vunpack.c.h.b16 %v1303
    %v1446 = vunpack.c.l.b16 %v1304
    %v1447 = vunpack.c.h.b16 %v1304
    %v1448 = vunpack.c.l.b16 %v1305
    %v1449 = vunpack.c.h.b16 %v1305
    %v1450 = vunpack.c.l.b16 %v1306
    %v1451 = vunpack.c.h.b16 %v1306
    %v1452 = vunpack.c.l.b16 %v1307
    %v1453 = vunpack.c.h.b16 %v1307
    %v1454 = vunpack.c.l.b16 %v1308
    %v1455 = vunpack.c.h.b16 %v1308
    %v1456 = vunpack.c.l.b16 %v1309
    %v1457 = vunpack.c.h.b16 %v1309
    %v1458 = vunpack.c.l.b16 %v1310
    %v1459 = vunpack.c.h.b16 %v1310
    %v1460 = vunpack.c.l.b16 %v1311
    %v1461 = vunpack.c.h.b16 %v1311
    %v1462 = vunpack.c.l.b16 %v1312
    %v1463 = vunpack.c.h.b16 %v1312
    %v1464 = vunpack.c.l.b16 %v1313
    %v1465 = vunpack.c.h.b16 %v1313
    %v1466 = vunpack.c.l.b16 %v1314
    %v1467 = vunpack.c.h.b16 %v1314
    %v1468 = vunpack.c.l.b16 %v1315
    %v1469 = vunpack.c.h.b16 %v1315
    %v1470 = vunpack.c.l.b16 %v1316
    %v1471 = vunpack.c.h.b16 %v1316
    %v1472 = vunpack.c.l.b16 %v1317
    %v1473 = vunpack.c.h.b16 %v1317
    %v1474 = vunpack.c.l.b16 %v1318
    %v1475 = vunpack.c.h.b16 %v1318
    %v1476 = vunpack.c.l.b16 %v1319
    %v1477 = vunpack.c.h.b16 %v1319
    %v1478 = vunpack.c.l.b16 %v1320
    %v1479 = vunpack.c.h.b16 %v1320
    %v1480 = vunpack.c.l.b16 %v1321
    %v1481 = vunpack.c.h.b16 %v1321
    %v1482 = vunpack.c.l.b16 %v1322
    %v1483 = vunpack.c.h.b16 %v1322
    %v1484 = vunpack.c.l.b16 %v1323
    %v1485 = vunpack.c.h.b16 %v1323
    %v1486 = vunpack.c.l.b16 %v1324
    %v1487 = vunpack.c.h.b16 %v1324
    %v1488 = vunpack.c.l.b16 %v1325
    %v1489 = vunpack.c.h.b16 %v1325
    %v1490 = vunpack.c.l.b16 %v1326
    %v1491 = vunpack.c.h.b16 %v1326
    %v1492 = vunpack.c.l.b16 %v1327
    %v1493 = vunpack.c.h.b16 %v1327
    %v1494 = vunpack.c.l.b16 %v1328
    %v1495 = vunpack.c.h.b16 %v1328
    %v1496 = vunpack.c.l.b16 %v1329
    %v1497 = vunpack.c.h.b16 %v1329
    %v1498 = vunpack.c.l.b16 %v1330
    %v1499 = vunpack.c.h.b16 %v1330
    %v1500 = vunpack.c.l.b16 %v1331
    %v1501 = vunpack.c.h.b16 %v1331
    %v1502 = vunpack.c.l.b16 %v1332
    %v1503 = vunpack.c.h.b16 %v1332
    %v1504 = vunpack.c.l.b16 %v1333
    %v1505 = vunpack.c.h.b16 %v1333
    %v1506 = vunpack.c.l.b16 %v1334
    %v1507 = vunpack.c.h.b16 %v1334
    %v1508 = vunpack.c.l.b16 %v1335
    %v1509 = vunpack.c.h.b16 %v1335
    %v1510 = vunpack.c.l.b16 %v1336
    %v1511 = vunpack.c.h.b16 %v1336
    %v1512 = vunpack.c.l.b16 %v1337
    %v1513 = vunpack.c.h.b16 %v1337
    %v1514 = vunpack.c.l.b16 %v1338
    %v1515 = vunpack.c.h.b16 %v1338
    %v1516 = vunpack.c.l.b16 %v1339
    %v1517 = vunpack.c.h.b16 %v1339
    %v1518 = vunpack.c.l.b16 %v1340
    %v1519 = vunpack.c.h.b16 %v1340
    %v1520 = vunpack.c.l.b16 %v1341
    %v1521 = vunpack.c.h.b16 %v1341
    %v1522 = vunpack.c.l.b16 %v1342
    %v1523 = vunpack.c.h.b16 %v1342
    %v1524 = vunpack.c.l.b16 %v1343
    %v1525 = vunpack.c.h.b16 %v1343
    %v1526 = vunpack.c.l.b16 %v1344
    %v1527 = vunpack.c.h.b16 %v1344
    %v1528 = vunpack.c.l.b16 %v1345
    %v1529 = vunpack.c.h.b16 %v1345
    %v1530 = vunpack.c.l.b16 %v1346
    %v1531 = vunpack.c.h.b16 %v1346
    %v1532 = vunpack.c.l.b16 %v1347
    %v1533 = vunpack.c.h.b16 %v1347
    %v1534 = vunpack.c.l.b16 %v1348
    %v1535 = vunpack.c.h.b16 %v1348
    %v1536 = vunpack.c.l.b16 %v1349
    %v1537 = vunpack.c.h.b16 %v1349
    %v1538 = vunpack.c.l.b16 %v1350
    %v1539 = vunpack.c.h.b16 %v1350
    %v1540 = vunpack.c.l.b16 %v1351
    %v1541 = vunpack.c.h.b16 %v1351
    %v1542 = vunpack.c.l.b16 %v1352
    %v1543 = vunpack.c.h.b16 %v1352
    %v1544 = vunpack.c.l.b16 %v1353
    %v1545 = vunpack.c.h.b16 %v1353
    %v1546 = vunpack.c.l.b16 %v1354
    %v1547 = vunpack.c.h.b16 %v1354
    %v1548 = vunpack.c.l.b16 %v1355
    %v1549 = vunpack.c.h.b16 %v1355
    %v1550 = vunpack.c.l.b16 %v1356
    %v1551 = vunpack.c.h.b16 %v1356
    %v1552 = vunpack.c.l.b16 %v1357
    %v1553 = vunpack.c.h.b16 %v1357
    %v1554 = vunpack.c.l.b16 %v1358
    %v1555 = vunpack.c.h.b16 %v1358
    %v1556 = vunpack.c.l.b16 %v1359
    %v1557 = vunpack.c.h.b16 %v1359
    %v1558 = vunpack.c.l.b16 %v1360
    %v1559 = vunpack.c.h.b16 %v1360
    %v1560 = vunpack.c.l.b16 %v1361
    %v1561 = vunpack.c.h.b16 %v1361
    %v1562 = vunpack.c.l.b16 %v1362
    %v1563 = vunpack.c.h.b16 %v1362
    %v1564 = vunpack.c.l.b16 %v1363
    %v1565 = vunpack.c.h.b16 %v1363
    %v1566 = vunpack.c.l.b16 %v1364
    %v1567 = vunpack.c.h.b16 %v1364
    %v1568 = vunpack.c.l.b16 %v1365
    %v1569 = vunpack.c.h.b16 %v1365
    %v1570 = vpack.c.b16 %v1444, %v1442
    %v1571 = vpack.c.b16 %v1445, %v1443
    %v1572 = vpack.c.b16 %v1448, %v1446
    %v1573 = vpack.c.b16 %v1449, %v1447
    %v1574 = vpack.c.b16 %v1452, %v1450
    %v1575 = vpack.c.b16 %v1453, %v1451
    %v1576 = vpack.c.b16 %v1456, %v1454
    %v1577 = vpack.c.b16 %v1457, %v1455
    %v1578 = vpack.c.b16 %v1460, %v1458
    %v1579 = vpack.c.b16 %v1461, %v1459
    %v1580 = vpack.c.b16 %v1464, %v1462
    %v1581 = vpack.c.b16 %v1465, %v1463
    %v1582 = vpack.c.b16 %v1468, %v1466
    %v1583 = vpack.c.b16 %v1469, %v1467
    %v1584 = vpack.c.b16 %v1472, %v1470
    %v1585 = vpack.c.b16 %v1473, %v1471
    %v1586 = vpack.c.b16 %v1476, %v1474
    %v1587 = vpack.c.b16 %v1477, %v1475
    %v1588 = vpack.c.b16 %v1480, %v1478
    %v1589 = vpack.c.b16 %v1481, %v1479
    %v1590 = vpack.c.b16 %v1484, %v1482
    %v1591 = vpack.c.b16 %v1485, %v1483
    %v1592 = vpack.c.b16 %v1488, %v1486
    %v1593 = vpack.c.b16 %v1489, %v1487
    %v1594 = vpack.c.b16 %v1492, %v1490
    %v1595 = vpack.c.b16 %v1493, %v1491
    %v1596 = vpack.c.b16 %v1496, %v1494
    %v1597 = vpack.c.b16 %v1497, %v1495
    %v1598 = vpack.c.b16 %v1500, %v1498
    %v1599 = vpack.c.b16 %v1501, %v1499
    %v1600 = vpack.c.b16 %v1504, %v1502
    %v1601 = vpack.c.b16 %v1505, %v1503
    %v1602 = vpack.c.b16 %v1508, %v1506
    %v1603 = vpack.c.b16 %v1509, %v1507
    %v1604 = vpack.c.b16 %v1512, %v1510
    %v1605 = vpack.c.b16 %v1513, %v1511
    %v1606 = vpack.c.b16 %v1516, %v1514
    %v1607 = vpack.c.b16 %v1517, %v1515
    %v1608 = vpack.c.b16 %v1520, %v1518
    %v1609 = vpack.c.b16 %v1521, %v1519
    %v1610 = vpack.c.b16 %v1524, %v1522
    %v1611 = vpack.c.b16 %v1525, %v1523
    %v1612 = vpack.c.b16 %v1528, %v1526
    %v1613 = vpack.c.b16 %v1529, %v1527
    %v1614 = vpack.c.b16 %v1532, %v1530
    %v1615 = vpack.c.b16 %v1533, %v1531
    %v1616 = vpack.c.b16 %v1536, %v1534
    %v1617 = vpack.c.b16 %v1537, %v1535
    %v1618 = vpack.c.b16 %v1540, %v1538
    %v1619 = vpack.c.b16 %v1541, %v1539
    %v1620 = vpack.c.b16 %v1544, %v1542
    %v1621 = vpack.c.b16 %v1545, %v1543
    %v1622 = vpack.c.b16 %v1548, %v1546
    %v1623 = vpack.c.b16 %v1549, %v1547
    %v1624 = vpack.c.b16 %v1552, %v1550
    %v1625 = vpack.c.b16 %v1553, %v1551
    %v1626 = vpack.c.b16 %v1556, %v1554
    %v1627 = vpack.c.b16 %v1557, %v1555
    %v1628 = vpack.c.b16 %v1560, %v1558
    %v1629 = vpack.c.b16 %v1561, %v1559
    %v1630 = vpack.c.b16 %v1564, %v1562
    %v1631 = vpack.c.b16 %v1565, %v1563
    %v1632 = vpack.c.b16 %v1568, %v1566
    %v1633 = vpack.c.b16 %v1569, %v1567
    %1698 = vmatprep.subr.bf16.mxu0 %v1571
    %1699 = vmatpush1.bf16.msra.mxu0 %v1570
    %1700 = vmatprep.subr.bf16.mxu0 %v1573
    %1701 = vmatpush1.bf16.msra.mxu0 %v1572
    %1702 = vmatprep.subr.bf16.mxu0 %v1575
    %1703 = vmatpush1.bf16.msra.mxu0 %v1574
    %1704 = vmatprep.subr.bf16.mxu0 %v1577
    %1705 = vmatpush1.bf16.msra.mxu0 %v1576
    %1706 = vmatprep.subr.bf16.mxu0 %v1579
    %1707 = vmatpush1.bf16.msra.mxu0 %v1578
    %1708 = vmatprep.subr.bf16.mxu0 %v1581
    %1709 = vmatpush1.bf16.msra.mxu0 %v1580
    %1710 = vmatprep.subr.bf16.mxu0 %v1583
    %1711 = vmatpush1.bf16.msra.mxu0 %v1582
    %1712 = vmatprep.subr.bf16.mxu0 %v1585
    %1713 = vmatpush1.bf16.msra.mxu0 %v1584
    %1714 = vmatprep.subr.bf16.mxu0 %v1587
    %1715 = vmatpush1.bf16.msra.mxu0 %v1586
    %1716 = vmatprep.subr.bf16.mxu0 %v1589
    %1717 = vmatpush1.bf16.msra.mxu0 %v1588
    %1718 = vmatprep.subr.bf16.mxu0 %v1591
    %1719 = vmatpush1.bf16.msra.mxu0 %v1590
    %1720 = vmatprep.subr.bf16.mxu0 %v1593
    %1721 = vmatpush1.bf16.msra.mxu0 %v1592
    %1722 = vmatprep.subr.bf16.mxu0 %v1595
    %1723 = vmatpush1.bf16.msra.mxu0 %v1594
    %1724 = vmatprep.subr.bf16.mxu0 %v1597
    %1725 = vmatpush1.bf16.msra.mxu0 %v1596
    %1726 = vmatprep.subr.bf16.mxu0 %v1599
    %1727 = vmatpush1.bf16.msra.mxu0 %v1598
    %1728 = vmatprep.subr.bf16.mxu0 %v1601
    %1729 = vmatpush1.bf16.msra.mxu0 %v1600
    %1730 = vmatprep.mubr.bf16.mxu0 %v729
    %1731 = vmatmul.mubr.bf16.gmra.mrb[0].mxu0 %v728
    %v1732 = vpop.f32.mrb[0].mxu0
    %v1733 = vadd.f32 %v1371, %v1732
    %v1734 = vpop.f32.mrb[0].mxu0
    %v1735 = vadd.f32 %v1375, %v1734
    %v1736 = vpop.f32.mrb[0].mxu0
    %v1737 = vadd.f32 %v1371, %v1736
    %v1738 = vpop.f32.mrb[0].mxu0
    %v1739 = vadd.f32 %v1375, %v1738
    %1740 = vmatprep.mubr.bf16.mxu0 %v733
    %1741 = vmatmul.mubr.bf16.gmra.mrb[0].mxu0 %v732
    %v1742 = vpop.f32.mrb[0].mxu0
    %v1743 = vadd.f32 %v1371, %v1742
    %v1744 = vpop.f32.mrb[0].mxu0
    %v1745 = vadd.f32 %v1375, %v1744
    %v1746 = vpop.f32.mrb[0].mxu0
    %v1747 = vadd.f32 %v1371, %v1746
    %v1748 = vpop.f32.mrb[0].mxu0
    %v1749 = vadd.f32 %v1375, %v1748
    %1750 = vmatprep.mubr.bf16.mxu0 %v737
    %1751 = vmatmul.mubr.bf16.gmra.mrb[0].mxu0 %v736
    %v1752 = vpop.f32.mrb[0].mxu0
    %v1753 = vadd.f32 %v1371, %v1752
    %v1754 = vpop.f32.mrb[0].mxu0
    %v1755 = vadd.f32 %v1375, %v1754
    %v1756 = vpop.f32.mrb[0].mxu0
    %v1757 = vadd.f32 %v1371, %v1756
    %v1758 = vpop.f32.mrb[0].mxu0
    %v1759 = vadd.f32 %v1375, %v1758
    %1760 = vmatprep.mubr.bf16.mxu0 %v741
    %1761 = vmatmul.mubr.bf16.gmra.mrb[0].mxu0 %v740
    %v1762 = vpop.f32.mrb[0].mxu0
    %v1763 = vadd.f32 %v1371, %v1762
    %v1764 = vpop.f32.mrb[0].mxu0
    %v1765 = vadd.f32 %v1375, %v1764
    %v1766 = vpop.f32.mrb[0].mxu0
    %v1767 = vadd.f32 %v1371, %v1766
    %v1768 = vpop.f32.mrb[0].mxu0
    %v1769 = vadd.f32 %v1375, %v1768
    %1770 = vdwg.mxu0
    %1771 = vmatprep.subr.bf16.mxu0 %v1603
    %1772 = vmatpush1.bf16.msra.mxu0 %v1602
    %1773 = vmatprep.subr.bf16.mxu0 %v1605
    %1774 = vmatpush1.bf16.msra.mxu0 %v1604
    %1775 = vmatprep.subr.bf16.mxu0 %v1607
    %1776 = vmatpush1.bf16.msra.mxu0 %v1606
    %1777 = vmatprep.subr.bf16.mxu0 %v1609
    %1778 = vmatpush1.bf16.msra.mxu0 %v1608
    %1779 = vmatprep.subr.bf16.mxu0 %v1611
    %1780 = vmatpush1.bf16.msra.mxu0 %v1610
    %1781 = vmatprep.subr.bf16.mxu0 %v1613
    %1782 = vmatpush1.bf16.msra.mxu0 %v1612
    %1783 = vmatprep.subr.bf16.mxu0 %v1615
    %1784 = vmatpush1.bf16.msra.mxu0 %v1614
    %1785 = vmatprep.subr.bf16.mxu0 %v1617
    %1786 = vmatpush1.bf16.msra.mxu0 %v1616
    %1787 = vmatprep.subr.bf16.mxu0 %v1619
    %1788 = vmatpush1.bf16.msra.mxu0 %v1618
    %1789 = vmatprep.subr.bf16.mxu0 %v1621
    %1790 = vmatpush1.bf16.msra.mxu0 %v1620
    %1791 = vmatprep.subr.bf16.mxu0 %v1623
    %1792 = vmatpush1.bf16.msra.mxu0 %v1622
    %1793 = vmatprep.subr.bf16.mxu0 %v1625
    %1794 = vmatpush1.bf16.msra.mxu0 %v1624
    %1795 = vmatprep.subr.bf16.mxu0 %v1627
    %1796 = vmatpush1.bf16.msra.mxu0 %v1626
    %1797 = vmatprep.subr.bf16.mxu0 %v1629
    %1798 = vmatpush1.bf16.msra.mxu0 %v1628
    %1799 = vmatprep.subr.bf16.mxu0 %v1631
    %1800 = vmatpush1.bf16.msra.mxu0 %v1630
    %1801 = vmatprep.subr.bf16.mxu0 %v1633
    %1802 = vmatpush1.bf16.msra.mxu0 %v1632
    %1803 = vmatprep.mubr.bf16.mxu0 %v731
    %1804 = vmatmul.mubr.bf16.gmra.mrb[0].mxu0 %v730
    %v1805 = vpop.f32.mrb[0].mxu0
    %v1806 = vadd.f32 %v1733, %v1805
    %v1807 = vpop.f32.mrb[0].mxu0
    %v1808 = vadd.f32 %v1735, %v1807
    %v1809 = vpop.f32.mrb[0].mxu0
    %v1810 = vadd.f32 %v1737, %v1809
    %v1811 = vpop.f32.mrb[0].mxu0
    %v1812 = vadd.f32 %v1739, %v1811
    %1813 = vmatprep.mubr.bf16.mxu0 %v735
    %1814 = vmatmul.mubr.bf16.gmra.mrb[0].mxu0 %v734
    %v1815 = vpop.f32.mrb[0].mxu0
    %v1816 = vadd.f32 %v1743, %v1815
    %v1817 = vpop.f32.mrb[0].mxu0
    %v1818 = vadd.f32 %v1745, %v1817
    %v1819 = vpop.f32.mrb[0].mxu0
    %v1820 = vadd.f32 %v1747, %v1819
    %v1821 = vpop.f32.mrb[0].mxu0
    %v1822 = vadd.f32 %v1749, %v1821
    %1823 = vmatprep.mubr.bf16.mxu0 %v739
    %1824 = vmatmul.mubr.bf16.gmra.mrb[0].mxu0 %v738
    %v1825 = vpop.f32.mrb[0].mxu0
    %v1826 = vadd.f32 %v1753, %v1825
    %v1827 = vpop.f32.mrb[0].mxu0
    %v1828 = vadd.f32 %v1755, %v1827
    %v1829 = vpop.f32.mrb[0].mxu0
    %v1830 = vadd.f32 %v1757, %v1829
    %v1831 = vpop.f32.mrb[0].mxu0
    %v1832 = vadd.f32 %v1759, %v1831
    %1833 = vmatprep.mubr.bf16.mxu0 %v743
    %1834 = vmatmul.mubr.bf16.gmra.mrb[0].mxu0 %v742
    %v1835 = vpop.f32.mrb[0].mxu0
    %v1836 = vadd.f32 %v1763, %v1835
    %v1837 = vpop.f32.mrb[0].mxu0
    %v1838 = vadd.f32 %v1765, %v1837
    %v1839 = vpop.f32.mrb[0].mxu0
    %v1840 = vadd.f32 %v1767, %v1839
    %v1841 = vpop.f32.mrb[0].mxu0
    %v1842 = vadd.f32 %v1769, %v1841
    %1843 = vdwg.mxu0
    %v1844 = vxor.u32 %v1806, 2147483648
    %v1845 = vxor.u32 %v1808, 2147483648
    %v1846 = vxor.u32 %v1810, 2147483648
    %v1847 = vxor.u32 %v1812, 2147483648
    %v1848 = vxor.u32 %v1816, 2147483648
    %v1849 = vxor.u32 %v1818, 2147483648
    %v1850 = vxor.u32 %v1820, 2147483648
    %v1851 = vxor.u32 %v1822, 2147483648
    %v1852 = vxor.u32 %v1826, 2147483648
    %v1853 = vxor.u32 %v1828, 2147483648
    %v1854 = vxor.u32 %v1830, 2147483648
    %v1855 = vxor.u32 %v1832, 2147483648
    %v1856 = vxor.u32 %v1836, 2147483648
    %v1857 = vxor.u32 %v1838, 2147483648
    %v1858 = vxor.u32 %v1840, 2147483648
    %v1859 = vxor.u32 %v1842, 2147483648
    %v1860 = vmul.f32 %v1844, 1.442695
    %v1861 = vpow.pop %v1860
    %v1862 = vmul.f32 %v1845, 1.442695
    %v1863 = vpow.pop %v1862
    %v1864 = vmul.f32 %v1846, 1.442695
    %v1865 = vpow.pop %v1864
    %v1866 = vmul.f32 %v1847, 1.442695
    %v1867 = vpow.pop %v1866
    %v1868 = vmul.f32 %v1848, 1.442695
    %v1869 = vpow.pop %v1868
    %v1870 = vmul.f32 %v1849, 1.442695
    %v1871 = vpow.pop %v1870
    %v1872 = vmul.f32 %v1850, 1.442695
    %v1873 = vpow.pop %v1872
    %v1874 = vmul.f32 %v1851, 1.442695
    %v1875 = vpow.pop %v1874
    %v1876 = vmul.f32 %v1852, 1.442695
    %v1877 = vpow.pop %v1876
    %v1878 = vmul.f32 %v1853, 1.442695
    %v1879 = vpow.pop %v1878
    %v1880 = vmul.f32 %v1854, 1.442695
    %v1881 = vpow.pop %v1880
    %v1882 = vmul.f32 %v1855, 1.442695
    %v1883 = vpow.pop %v1882
    %v1884 = vmul.f32 %v1856, 1.442695
    %v1885 = vpow.pop %v1884
    %v1886 = vmul.f32 %v1857, 1.442695
    %v1887 = vpow.pop %v1886
    %v1888 = vmul.f32 %v1858, 1.442695
    %v1889 = vpow.pop %v1888
    %v1890 = vmul.f32 %v1859, 1.442695
    %v1891 = vpow.pop %v1890
    %v1892 = vadd.f32 %v1861, 1.0
    %v1893 = vadd.f32 %v1863, 1.0
    %v1894 = vadd.f32 %v1865, 1.0
    %v1895 = vadd.f32 %v1867, 1.0
    %v1896 = vadd.f32 %v1869, 1.0
    %v1897 = vadd.f32 %v1871, 1.0
    %v1898 = vadd.f32 %v1873, 1.0
    %v1899 = vadd.f32 %v1875, 1.0
    %v1900 = vadd.f32 %v1877, 1.0
    %v1901 = vadd.f32 %v1879, 1.0
    %v1902 = vadd.f32 %v1881, 1.0
    %v1903 = vadd.f32 %v1883, 1.0
    %v1904 = vadd.f32 %v1885, 1.0
    %v1905 = vadd.f32 %v1887, 1.0
    %v1906 = vadd.f32 %v1889, 1.0
    %v1907 = vadd.f32 %v1891, 1.0
    %v1908 = vrcp.pop %v1892
    %v1909 = vmul.f32 1.0, %v1908
    %v1910 = vrcp.pop %v1893
    %v1911 = vmul.f32 1.0, %v1910
    %v1912 = vrcp.pop %v1894
    %v1913 = vmul.f32 1.0, %v1912
    %v1914 = vrcp.pop %v1895
    %v1915 = vmul.f32 1.0, %v1914
    %v1916 = vrcp.pop %v1896
    %v1917 = vmul.f32 1.0, %v1916
    %v1918 = vrcp.pop %v1897
    %v1919 = vmul.f32 1.0, %v1918
    %v1920 = vrcp.pop %v1898
    %v1921 = vmul.f32 1.0, %v1920
    %v1922 = vrcp.pop %v1899
    %v1923 = vmul.f32 1.0, %v1922
    %v1924 = vrcp.pop %v1900
    %v1925 = vmul.f32 1.0, %v1924
    %v1926 = vrcp.pop %v1901
    %v1927 = vmul.f32 1.0, %v1926
    %v1928 = vrcp.pop %v1902
    %v1929 = vmul.f32 1.0, %v1928
    %v1930 = vrcp.pop %v1903
    %v1931 = vmul.f32 1.0, %v1930
    %v1932 = vrcp.pop %v1904
    %v1933 = vmul.f32 1.0, %v1932
    %v1934 = vrcp.pop %v1905
    %v1935 = vmul.f32 1.0, %v1934
    %v1936 = vrcp.pop %v1906
    %v1937 = vmul.f32 1.0, %v1936
    %v1938 = vrcp.pop %v1907
    %v1939 = vmul.f32 1.0, %v1938
    %v1940 = vmul.f32 %v1286, %v1909
    %v1941 = vmul.f32 %v1287, %v1911
    %v1942 = vmul.f32 %v1288, %v1913
    %v1943 = vmul.f32 %v1289, %v1915
    %v1944 = vmul.f32 %v1290, %v1917
    %v1945 = vmul.f32 %v1291, %v1919
    %v1946 = vmul.f32 %v1292, %v1921
    %v1947 = vmul.f32 %v1293, %v1923
    %v1948 = vmul.f32 %v1294, %v1925
    %v1949 = vmul.f32 %v1295, %v1927
    %v1950 = vmul.f32 %v1296, %v1929
    %v1951 = vmul.f32 %v1297, %v1931
    %v1952 = vmul.f32 %v1298, %v1933
    %v1953 = vmul.f32 %v1299, %v1935
    %v1954 = vmul.f32 %v1300, %v1937
    %v1955 = vmul.f32 %v1301, %v1939
    %v1956 = vld [vmem:[%s7] ss:$2 sm:$0x3]
    %v1958 = vlaneseq
    %v1959 = vshrl.u32 %v1958, 7
    %v1960 = vsub.s32 0, %v1959
    %v1961 = vrot.slane %v1956, %v1960
    %v1962 = vlaneseq
    %v1963 = vshrl.u32 %v1962, 7
    %v1964 = vsub.s32 1, %v1963
    %v1965 = vrot.slane %v1956, %v1964
    %v1968 = vmul.f32 %v1940, %v1961
    %v1969 = vmul.f32 %v1941, %v1965
    %v1970 = vmul.f32 %v1942, %v1961
    %v1971 = vmul.f32 %v1943, %v1965
    %v1972 = vmul.f32 %v1944, %v1961
    %v1973 = vmul.f32 %v1945, %v1965
    %v1974 = vmul.f32 %v1946, %v1961
    %v1975 = vmul.f32 %v1947, %v1965
    %v1976 = vmul.f32 %v1948, %v1961
    %v1977 = vmul.f32 %v1949, %v1965
    %v1978 = vmul.f32 %v1950, %v1961
    %v1979 = vmul.f32 %v1951, %v1965
    %v1980 = vmul.f32 %v1952, %v1961
    %v1981 = vmul.f32 %v1953, %v1965
    %v1982 = vmul.f32 %v1954, %v1961
    %v1983 = vmul.f32 %v1955, %v1965
    %v1984 = vadd.f32 %v1968, %v1969
    %1985 = vadd.xlane.f32.xlu0 %v1984
    %v1986 = vpop.xlane.xlu0 %1985
    %v1987 = vadd.f32 %v1970, %v1971
    %1988 = vadd.xlane.f32.xlu0 %v1987
    %v1989 = vpop.xlane.xlu0 %1988
    %v1990 = vadd.f32 %v1972, %v1973
    %1991 = vadd.xlane.f32.xlu0 %v1990
    %v1992 = vpop.xlane.xlu0 %1991
    %v1993 = vadd.f32 %v1974, %v1975
    %1994 = vadd.xlane.f32.xlu0 %v1993
    %v1995 = vpop.xlane.xlu0 %1994
    %v1996 = vadd.f32 %v1976, %v1977
    %1997 = vadd.xlane.f32.xlu0 %v1996
    %v1998 = vpop.xlane.xlu0 %1997
    %v1999 = vadd.f32 %v1978, %v1979
    %2000 = vadd.xlane.f32.xlu0 %v1999
    %v2001 = vpop.xlane.xlu0 %2000
    %v2002 = vadd.f32 %v1980, %v1981
    %2003 = vadd.xlane.f32.xlu0 %v2002
    %v2004 = vpop.xlane.xlu0 %2003
    %v2005 = vadd.f32 %v1982, %v1983
    %2006 = vadd.xlane.f32.xlu0 %v2005
    %v2007 = vpop.xlane.xlu0 %2006
    %v2008 = vld [vmem:[%s8] sm:$0x1]
    %v2010 = vlaneseq
    %v2011 = vshrl.u32 %v2010, 7
    %v2012 = vsub.s32 0, %v2011
    %v2013 = vrot.slane %v2008, %v2012
    %v2015 = vadd.f32 %v1986, %v2013
    %v2016 = vadd.f32 %v1989, %v2013
    %v2017 = vadd.f32 %v1992, %v2013
    %v2018 = vadd.f32 %v1995, %v2013
    %v2019 = vadd.f32 %v1998, %v2013
    %v2020 = vadd.f32 %v2001, %v2013
    %v2021 = vadd.f32 %v2004, %v2013
    %v2022 = vadd.f32 %v2007, %v2013
    %vm2023 = vcmask 7168
    %2024 = vst.msk [vmem:[%s12] sm:$0xff] %vm2023, %v2015
    %2025 = vst.msk [vmem:[%s12 + $0x8] sm:$0xff] %vm2023, %v2016
    %2026 = vst.msk [vmem:[%s12 + $0x10] sm:$0xff] %vm2023, %v2017
    %2027 = vst.msk [vmem:[%s12 + $0x18] sm:$0xff] %vm2023, %v2018
    %2028 = vst.msk [vmem:[%s12 + $0x20] sm:$0xff] %vm2023, %v2019
    %2029 = vst.msk [vmem:[%s12 + $0x28] sm:$0xff] %vm2023, %v2020
    %2030 = vst.msk [vmem:[%s12 + $0x30] sm:$0xff] %vm2023, %v2021
    %2031 = vst.msk [vmem:[%s12 + $0x38] sm:$0xff] %vm2023, %v2022
    %v2032 = vsel %vm2023, %v2015, -inf
    %v2033 = vsel %vm2023, %v2016, -inf
    %v2034 = vsel %vm2023, %v2017, -inf
    %v2035 = vsel %vm2023, %v2018, -inf
    %v2036 = vsel %vm2023, %v2019, -inf
    %v2037 = vmax.f32 %v2032, %v2036
    %v2038 = vsel %vm2023, %v2020, -inf
    %v2039 = vmax.f32 %v2033, %v2038
    %v2040 = vsel %vm2023, %v2021, -inf
    %v2041 = vmax.f32 %v2034, %v2040
    %v2042 = vsel %vm2023, %v2022, -inf
    %v2043 = vmax.f32 %v2035, %v2042
    %v2044 = vmax.f32 %v2037, %v2039
    %v2045 = vmax.f32 %v2041, %v2043
    %v2046 = vmax.f32 %v2044, %v2045
    %v2047 = vrot.slane %v2046, 4
    %v2048 = vmax.f32 %v2046, %v2047
    %v2049 = vrot.slane %v2048, 2
    %v2050 = vmax.f32 %v2048, %v2049
    %v2051 = vrot.slane %v2050, 1
    %v2052 = vmax.f32 %v2050, %v2051
    %v2053 = vsub.f32 %v2015, %v2052
    %v2054 = vsub.f32 %v2016, %v2052
    %v2055 = vsub.f32 %v2017, %v2052
    %v2056 = vsub.f32 %v2018, %v2052
    %v2057 = vsub.f32 %v2019, %v2052
    %v2058 = vsub.f32 %v2020, %v2052
    %v2059 = vsub.f32 %v2021, %v2052
    %v2060 = vsub.f32 %v2022, %v2052
    %v2061 = vmul.f32 %v2053, 1.442695
    %v2062 = vpow.pop %v2061
    %v2063 = vmul.f32 %v2054, 1.442695
    %v2064 = vpow.pop %v2063
    %v2065 = vmul.f32 %v2055, 1.442695
    %v2066 = vpow.pop %v2065
    %v2067 = vmul.f32 %v2056, 1.442695
    %v2068 = vpow.pop %v2067
    %v2069 = vmul.f32 %v2057, 1.442695
    %v2070 = vpow.pop %v2069
    %v2071 = vmul.f32 %v2058, 1.442695
    %v2072 = vpow.pop %v2071
    %v2073 = vmul.f32 %v2059, 1.442695
    %v2074 = vpow.pop %v2073
    %v2075 = vmul.f32 %v2060, 1.442695
    %v2076 = vpow.pop %v2075
    %v2077 = vsel %vm2023, %v2062, 0.0
    %v2078 = vsel %vm2023, %v2064, 0.0
    %v2079 = vadd.f32 %v2077, %v2078
    %v2080 = vsel %vm2023, %v2066, 0.0
    %v2081 = vadd.f32 %v2079, %v2080
    %v2082 = vsel %vm2023, %v2068, 0.0
    %v2083 = vadd.f32 %v2081, %v2082
    %v2084 = vsel %vm2023, %v2070, 0.0
    %v2085 = vadd.f32 %v2083, %v2084
    %v2086 = vsel %vm2023, %v2072, 0.0
    %v2087 = vadd.f32 %v2085, %v2086
    %v2088 = vsel %vm2023, %v2074, 0.0
    %v2089 = vadd.f32 %v2087, %v2088
    %v2090 = vsel %vm2023, %v2076, 0.0
    %v2091 = vadd.f32 %v2089, %v2090
    %v2092 = vrot.slane %v2091, 4
    %v2093 = vadd.f32 %v2091, %v2092
    %v2094 = vrot.slane %v2093, 2
    %v2095 = vadd.f32 %v2093, %v2094
    %v2096 = vrot.slane %v2095, 1
    %v2097 = vadd.f32 %v2095, %v2096
    %v2098 = vrcp.pop %v2097
    %v2099 = vmul.f32 %v2062, %v2098
    %v2100 = vmul.f32 %v2064, %v2098
    %v2101 = vmul.f32 %v2066, %v2098
    %v2102 = vmul.f32 %v2068, %v2098
    %v2103 = vmul.f32 %v2070, %v2098
    %v2104 = vmul.f32 %v2072, %v2098
    %v2105 = vmul.f32 %v2074, %v2098
    %v2106 = vmul.f32 %v2076, %v2098
    %2108 = vset.pattern.permute.xlu0 0
    %2109 = vperm.xlu0 %2108, %v2099
    %v2110 = vpop.permute.xlu0 %2109
    %2113 = vset.pattern.permute.xlu0 0
    %2114 = vperm.xlu0 %2113, %v2100
    %v2115 = vpop.permute.xlu0 %2114
    %2118 = vset.pattern.permute.xlu0 0
    %2119 = vperm.xlu0 %2118, %v2101
    %v2120 = vpop.permute.xlu0 %2119
    %2123 = vset.pattern.permute.xlu0 0
    %2124 = vperm.xlu0 %2123, %v2102
    %v2125 = vpop.permute.xlu0 %2124
    %2128 = vset.pattern.permute.xlu0 0
    %2129 = vperm.xlu0 %2128, %v2103
    %v2130 = vpop.permute.xlu0 %2129
    %2133 = vset.pattern.permute.xlu0 0
    %2134 = vperm.xlu0 %2133, %v2104
    %v2135 = vpop.permute.xlu0 %2134
    %2138 = vset.pattern.permute.xlu0 0
    %2139 = vperm.xlu0 %2138, %v2105
    %v2140 = vpop.permute.xlu0 %2139
    %2143 = vset.pattern.permute.xlu0 0
    %2144 = vperm.xlu0 %2143, %v2106
    %v2145 = vpop.permute.xlu0 %2144
    %v2147 = vmul.f32 %v2110, %v696
    %v2148 = vmul.f32 %v2110, %v697
    %v2149 = vmul.f32 %v2110, %v698
    %v2150 = vmul.f32 %v2110, %v699
    %v2151 = vmul.f32 %v2115, %v700
    %v2152 = vmul.f32 %v2115, %v701
    %v2153 = vmul.f32 %v2115, %v702
    %v2154 = vmul.f32 %v2115, %v703
    %v2155 = vmul.f32 %v2120, %v704
    %v2156 = vmul.f32 %v2120, %v705
    %v2157 = vmul.f32 %v2120, %v706
    %v2158 = vmul.f32 %v2120, %v707
    %v2159 = vmul.f32 %v2125, %v708
    %v2160 = vmul.f32 %v2125, %v709
    %v2161 = vmul.f32 %v2125, %v710
    %v2162 = vmul.f32 %v2125, %v711
    %v2163 = vmul.f32 %v2130, %v712
    %v2164 = vmul.f32 %v2130, %v713
    %v2165 = vmul.f32 %v2130, %v714
    %v2166 = vmul.f32 %v2130, %v715
    %v2167 = vmul.f32 %v2135, %v716
    %v2168 = vmul.f32 %v2135, %v717
    %v2169 = vmul.f32 %v2135, %v718
    %v2170 = vmul.f32 %v2135, %v719
    %v2171 = vmul.f32 %v2140, %v720
    %v2172 = vmul.f32 %v2140, %v721
    %v2173 = vmul.f32 %v2140, %v722
    %v2174 = vmul.f32 %v2140, %v723
    %v2175 = vmul.f32 %v2145, %v724
    %v2176 = vmul.f32 %v2145, %v725
    %v2177 = vmul.f32 %v2145, %v726
    %v2178 = vmul.f32 %v2145, %v727
    %v2179 = vadd.f32 %v2147, %v2151
    %v2180 = vadd.f32 %v2179, %v2155
    %v2181 = vadd.f32 %v2180, %v2159
    %v2182 = vadd.f32 %v2181, %v2163
    %v2183 = vadd.f32 %v2182, %v2167
    %v2184 = vadd.f32 %v2183, %v2171
    %v2185 = vadd.f32 %v2184, %v2175
    %v2186 = vrot.slane %v2185, 4
    %v2187 = vadd.f32 %v2185, %v2186
    %v2188 = vrot.slane %v2187, 2
    %v2189 = vadd.f32 %v2187, %v2188
    %v2190 = vrot.slane %v2189, 1
    %v2191 = vadd.f32 %v2189, %v2190
    %v2192 = vadd.f32 %v2148, %v2152
    %v2193 = vadd.f32 %v2192, %v2156
    %v2194 = vadd.f32 %v2193, %v2160
    %v2195 = vadd.f32 %v2194, %v2164
    %v2196 = vadd.f32 %v2195, %v2168
    %v2197 = vadd.f32 %v2196, %v2172
    %v2198 = vadd.f32 %v2197, %v2176
    %v2199 = vrot.slane %v2198, 4
    %v2200 = vadd.f32 %v2198, %v2199
    %v2201 = vrot.slane %v2200, 2
    %v2202 = vadd.f32 %v2200, %v2201
    %v2203 = vrot.slane %v2202, 1
    %v2204 = vadd.f32 %v2202, %v2203
    %v2205 = vadd.f32 %v2149, %v2153
    %v2206 = vadd.f32 %v2205, %v2157
    %v2207 = vadd.f32 %v2206, %v2161
    %v2208 = vadd.f32 %v2207, %v2165
    %v2209 = vadd.f32 %v2208, %v2169
    %v2210 = vadd.f32 %v2209, %v2173
    %v2211 = vadd.f32 %v2210, %v2177
    %v2212 = vrot.slane %v2211, 4
    %v2213 = vadd.f32 %v2211, %v2212
    %v2214 = vrot.slane %v2213, 2
    %v2215 = vadd.f32 %v2213, %v2214
    %v2216 = vrot.slane %v2215, 1
    %v2217 = vadd.f32 %v2215, %v2216
    %v2218 = vadd.f32 %v2150, %v2154
    %v2219 = vadd.f32 %v2218, %v2158
    %v2220 = vadd.f32 %v2219, %v2162
    %v2221 = vadd.f32 %v2220, %v2166
    %v2222 = vadd.f32 %v2221, %v2170
    %v2223 = vadd.f32 %v2222, %v2174
    %v2224 = vadd.f32 %v2223, %v2178
    %v2225 = vrot.slane %v2224, 4
    %v2226 = vadd.f32 %v2224, %v2225
    %v2227 = vrot.slane %v2226, 2
    %v2228 = vadd.f32 %v2226, %v2227
    %v2229 = vrot.slane %v2228, 1
    %v2230 = vadd.f32 %v2228, %v2229
    %v2231 = vld [vmem:[%s9] ss:$2 sm:$0xf]
    %v2233 = vlaneseq
    %v2234 = vshrl.u32 %v2233, 7
    %v2235 = vsub.s32 0, %v2234
    %v2236 = vrot.slane %v2231, %v2235
    %v2237 = vlaneseq
    %v2238 = vshrl.u32 %v2237, 7
    %v2239 = vsub.s32 1, %v2238
    %v2240 = vrot.slane %v2231, %v2239
    %v2241 = vlaneseq
    %v2242 = vshrl.u32 %v2241, 7
    %v2243 = vsub.s32 2, %v2242
    %v2244 = vrot.slane %v2231, %v2243
    %v2245 = vlaneseq
    %v2246 = vshrl.u32 %v2245, 7
    %v2247 = vsub.s32 3, %v2246
    %v2248 = vrot.slane %v2231, %v2247
    %v2253 = vmul.f32 %v2191, %v2236
    %v2254 = vmul.f32 %v2204, %v2240
    %v2255 = vmul.f32 %v2217, %v2244
    %v2256 = vmul.f32 %v2230, %v2248
    %vm2257 = vcmask 1040384
    %v2258 = vsel %vm2257, %v2253, 0.0
    %v2259 = vsel %vm2257, %v2254, 0.0
    %v2260 = vadd.f32 %v2258, %v2259
    %v2261 = vsel %vm2257, %v2255, 0.0
    %v2262 = vadd.f32 %v2260, %v2261
    %v2263 = vsel %vm2257, %v2256, 0.0
    %v2264 = vadd.f32 %v2262, %v2263
    %2265 = vadd.xlane.f32.xlu0 %v2264
    %v2266 = vpop.xlane.xlu0 %2265
    %v2267 = vld [vmem:[%s10] sm:$0x1]
    %v2268 = vadd.f32 %v2266, %v2267
    %vm2269 = vcmask 0
    %2270 = vst.msk [vmem:[#allocation10] sm:$0x1] %vm2269, %v2268
    %s2271 = scalar_lea.vmem %s7, 1
    %v2272 = vld [vmem:[%s2271] ss:$2 sm:$0x3]
    %v2274 = vlaneseq
    %v2275 = vshrl.u32 %v2274, 7
    %v2276 = vsub.s32 0, %v2275
    %v2277 = vrot.slane %v2272, %v2276
    %v2278 = vlaneseq
    %v2279 = vshrl.u32 %v2278, 7
    %v2280 = vsub.s32 1, %v2279
    %v2281 = vrot.slane %v2272, %v2280
    %v2284 = vmul.f32 %v1940, %v2277
    %v2285 = vmul.f32 %v1941, %v2281
    %v2286 = vmul.f32 %v1942, %v2277
    %v2287 = vmul.f32 %v1943, %v2281
    %v2288 = vmul.f32 %v1944, %v2277
    %v2289 = vmul.f32 %v1945, %v2281
    %v2290 = vmul.f32 %v1946, %v2277
    %v2291 = vmul.f32 %v1947, %v2281
    %v2292 = vmul.f32 %v1948, %v2277
    %v2293 = vmul.f32 %v1949, %v2281
    %v2294 = vmul.f32 %v1950, %v2277
    %v2295 = vmul.f32 %v1951, %v2281
    %v2296 = vmul.f32 %v1952, %v2277
    %v2297 = vmul.f32 %v1953, %v2281
    %v2298 = vmul.f32 %v1954, %v2277
    %v2299 = vmul.f32 %v1955, %v2281
    %v2300 = vadd.f32 %v2284, %v2285
    %2301 = vadd.xlane.f32.xlu0 %v2300
    %v2302 = vpop.xlane.xlu0 %2301
    %v2303 = vadd.f32 %v2286, %v2287
    %2304 = vadd.xlane.f32.xlu0 %v2303
    %v2305 = vpop.xlane.xlu0 %2304
    %v2306 = vadd.f32 %v2288, %v2289
    %2307 = vadd.xlane.f32.xlu0 %v2306
    %v2308 = vpop.xlane.xlu0 %2307
    %v2309 = vadd.f32 %v2290, %v2291
    %2310 = vadd.xlane.f32.xlu0 %v2309
    %v2311 = vpop.xlane.xlu0 %2310
    %v2312 = vadd.f32 %v2292, %v2293
    %2313 = vadd.xlane.f32.xlu0 %v2312
    %v2314 = vpop.xlane.xlu0 %2313
    %v2315 = vadd.f32 %v2294, %v2295
    %2316 = vadd.xlane.f32.xlu0 %v2315
    %v2317 = vpop.xlane.xlu0 %2316
    %v2318 = vadd.f32 %v2296, %v2297
    %2319 = vadd.xlane.f32.xlu0 %v2318
    %v2320 = vpop.xlane.xlu0 %2319
    %v2321 = vadd.f32 %v2298, %v2299
    %2322 = vadd.xlane.f32.xlu0 %v2321
    %v2323 = vpop.xlane.xlu0 %2322
    %v2324 = vld [vmem:[%s8] sm:$0x1]
    %v2326 = vlaneseq
    %v2327 = vshrl.u32 %v2326, 7
    %v2328 = vsub.s32 0, %v2327
    %v2329 = vrot.slane %v2324, %v2328
    %v2331 = vadd.f32 %v2302, %v2329
    %v2332 = vadd.f32 %v2305, %v2329
    %v2333 = vadd.f32 %v2308, %v2329
    %v2334 = vadd.f32 %v2311, %v2329
    %v2335 = vadd.f32 %v2314, %v2329
    %v2336 = vadd.f32 %v2317, %v2329
    %v2337 = vadd.f32 %v2320, %v2329
    %v2338 = vadd.f32 %v2323, %v2329
    %vm2339 = vcmask 15368
    %2340 = vst.msk [vmem:[%s12] sm:$0xff] %vm2339, %v2331
    %2341 = vst.msk [vmem:[%s12 + $0x8] sm:$0xff] %vm2339, %v2332
    %2342 = vst.msk [vmem:[%s12 + $0x10] sm:$0xff] %vm2339, %v2333
    %2343 = vst.msk [vmem:[%s12 + $0x18] sm:$0xff] %vm2339, %v2334
    %2344 = vst.msk [vmem:[%s12 + $0x20] sm:$0xff] %vm2339, %v2335
    %2345 = vst.msk [vmem:[%s12 + $0x28] sm:$0xff] %vm2339, %v2336
    %2346 = vst.msk [vmem:[%s12 + $0x30] sm:$0xff] %vm2339, %v2337
    %2347 = vst.msk [vmem:[%s12 + $0x38] sm:$0xff] %vm2339, %v2338
    %v2348 = vsel %vm2339, %v2331, -inf
    %v2349 = vsel %vm2339, %v2332, -inf
    %v2350 = vsel %vm2339, %v2333, -inf
    %v2351 = vsel %vm2339, %v2334, -inf
    %v2352 = vsel %vm2339, %v2335, -inf
    %v2353 = vmax.f32 %v2348, %v2352
    %v2354 = vsel %vm2339, %v2336, -inf
    %v2355 = vmax.f32 %v2349, %v2354
    %v2356 = vsel %vm2339, %v2337, -inf
    %v2357 = vmax.f32 %v2350, %v2356
    %v2358 = vsel %vm2339, %v2338, -inf
    %v2359 = vmax.f32 %v2351, %v2358
    %v2360 = vmax.f32 %v2353, %v2355
    %v2361 = vmax.f32 %v2357, %v2359
    %v2362 = vmax.f32 %v2360, %v2361
    %v2363 = vrot.slane %v2362, 4
    %v2364 = vmax.f32 %v2362, %v2363
    %v2365 = vrot.slane %v2364, 2
    %v2366 = vmax.f32 %v2364, %v2365
    %v2367 = vrot.slane %v2366, 1
    %v2368 = vmax.f32 %v2366, %v2367
    %v2369 = vsub.f32 %v2331, %v2368
    %v2370 = vsub.f32 %v2332, %v2368
    %v2371 = vsub.f32 %v2333, %v2368
    %v2372 = vsub.f32 %v2334, %v2368
    %v2373 = vsub.f32 %v2335, %v2368
    %v2374 = vsub.f32 %v2336, %v2368
    %v2375 = vsub.f32 %v2337, %v2368
    %v2376 = vsub.f32 %v2338, %v2368
    %v2377 = vmul.f32 %v2369, 1.442695
    %v2378 = vpow.pop %v2377
    %v2379 = vmul.f32 %v2370, 1.442695
    %v2380 = vpow.pop %v2379
    %v2381 = vmul.f32 %v2371, 1.442695
    %v2382 = vpow.pop %v2381
    %v2383 = vmul.f32 %v2372, 1.442695
    %v2384 = vpow.pop %v2383
    %v2385 = vmul.f32 %v2373, 1.442695
    %v2386 = vpow.pop %v2385
    %v2387 = vmul.f32 %v2374, 1.442695
    %v2388 = vpow.pop %v2387
    %v2389 = vmul.f32 %v2375, 1.442695
    %v2390 = vpow.pop %v2389
    %v2391 = vmul.f32 %v2376, 1.442695
    %v2392 = vpow.pop %v2391
    %v2393 = vsel %vm2339, %v2378, 0.0
    %v2394 = vsel %vm2339, %v2380, 0.0
    %v2395 = vadd.f32 %v2393, %v2394
    %v2396 = vsel %vm2339, %v2382, 0.0
    %v2397 = vadd.f32 %v2395, %v2396
    %v2398 = vsel %vm2339, %v2384, 0.0
    %v2399 = vadd.f32 %v2397, %v2398
    %v2400 = vsel %vm2339, %v2386, 0.0
    %v2401 = vadd.f32 %v2399, %v2400
    %v2402 = vsel %vm2339, %v2388, 0.0
    %v2403 = vadd.f32 %v2401, %v2402
    %v2404 = vsel %vm2339, %v2390, 0.0
    %v2405 = vadd.f32 %v2403, %v2404
    %v2406 = vsel %vm2339, %v2392, 0.0
    %v2407 = vadd.f32 %v2405, %v2406
    %v2408 = vrot.slane %v2407, 4
    %v2409 = vadd.f32 %v2407, %v2408
    %v2410 = vrot.slane %v2409, 2
    %v2411 = vadd.f32 %v2409, %v2410
    %v2412 = vrot.slane %v2411, 1
    %v2413 = vadd.f32 %v2411, %v2412
    %v2414 = vrcp.pop %v2413
    %v2415 = vmul.f32 %v2378, %v2414
    %v2416 = vmul.f32 %v2380, %v2414
    %v2417 = vmul.f32 %v2382, %v2414
    %v2418 = vmul.f32 %v2384, %v2414
    %v2419 = vmul.f32 %v2386, %v2414
    %v2420 = vmul.f32 %v2388, %v2414
    %v2421 = vmul.f32 %v2390, %v2414
    %v2422 = vmul.f32 %v2392, %v2414
    %2424 = vset.pattern.permute.xlu0 1
    %2425 = vperm.xlu0 %2424, %v2415
    %v2426 = vpop.permute.xlu0 %2425
    %2429 = vset.pattern.permute.xlu0 1
    %2430 = vperm.xlu0 %2429, %v2416
    %v2431 = vpop.permute.xlu0 %2430
    %2434 = vset.pattern.permute.xlu0 1
    %2435 = vperm.xlu0 %2434, %v2417
    %v2436 = vpop.permute.xlu0 %2435
    %2439 = vset.pattern.permute.xlu0 1
    %2440 = vperm.xlu0 %2439, %v2418
    %v2441 = vpop.permute.xlu0 %2440
    %2444 = vset.pattern.permute.xlu0 1
    %2445 = vperm.xlu0 %2444, %v2419
    %v2446 = vpop.permute.xlu0 %2445
    %2449 = vset.pattern.permute.xlu0 1
    %2450 = vperm.xlu0 %2449, %v2420
    %v2451 = vpop.permute.xlu0 %2450
    %2454 = vset.pattern.permute.xlu0 1
    %2455 = vperm.xlu0 %2454, %v2421
    %v2456 = vpop.permute.xlu0 %2455
    %2459 = vset.pattern.permute.xlu0 1
    %2460 = vperm.xlu0 %2459, %v2422
    %v2461 = vpop.permute.xlu0 %2460
    %v2463 = vmul.f32 %v2426, %v696
    %v2464 = vmul.f32 %v2426, %v697
    %v2465 = vmul.f32 %v2426, %v698
    %v2466 = vmul.f32 %v2426, %v699
    %v2467 = vmul.f32 %v2431, %v700
    %v2468 = vmul.f32 %v2431, %v701
    %v2469 = vmul.f32 %v2431, %v702
    %v2470 = vmul.f32 %v2431, %v703
    %v2471 = vmul.f32 %v2436, %v704
    %v2472 = vmul.f32 %v2436, %v705
    %v2473 = vmul.f32 %v2436, %v706
    %v2474 = vmul.f32 %v2436, %v707
    %v2475 = vmul.f32 %v2441, %v708
    %v2476 = vmul.f32 %v2441, %v709
    %v2477 = vmul.f32 %v2441, %v710
    %v2478 = vmul.f32 %v2441, %v711
    %v2479 = vmul.f32 %v2446, %v712
    %v2480 = vmul.f32 %v2446, %v713
    %v2481 = vmul.f32 %v2446, %v714
    %v2482 = vmul.f32 %v2446, %v715
    %v2483 = vmul.f32 %v2451, %v716
    %v2484 = vmul.f32 %v2451, %v717
    %v2485 = vmul.f32 %v2451, %v718
    %v2486 = vmul.f32 %v2451, %v719
    %v2487 = vmul.f32 %v2456, %v720
    %v2488 = vmul.f32 %v2456, %v721
    %v2489 = vmul.f32 %v2456, %v722
    %v2490 = vmul.f32 %v2456, %v723
    %v2491 = vmul.f32 %v2461, %v724
    %v2492 = vmul.f32 %v2461, %v725
    %v2493 = vmul.f32 %v2461, %v726
    %v2494 = vmul.f32 %v2461, %v727
    %v2495 = vadd.f32 %v2463, %v2467
    %v2496 = vadd.f32 %v2495, %v2471
    %v2497 = vadd.f32 %v2496, %v2475
    %v2498 = vadd.f32 %v2497, %v2479
    %v2499 = vadd.f32 %v2498, %v2483
    %v2500 = vadd.f32 %v2499, %v2487
    %v2501 = vadd.f32 %v2500, %v2491
    %v2502 = vrot.slane %v2501, 4
    %v2503 = vadd.f32 %v2501, %v2502
    %v2504 = vrot.slane %v2503, 2
    %v2505 = vadd.f32 %v2503, %v2504
    %v2506 = vrot.slane %v2505, 1
    %v2507 = vadd.f32 %v2505, %v2506
    %v2508 = vadd.f32 %v2464, %v2468
    %v2509 = vadd.f32 %v2508, %v2472
    %v2510 = vadd.f32 %v2509, %v2476
    %v2511 = vadd.f32 %v2510, %v2480
    %v2512 = vadd.f32 %v2511, %v2484
    %v2513 = vadd.f32 %v2512, %v2488
    %v2514 = vadd.f32 %v2513, %v2492
    %v2515 = vrot.slane %v2514, 4
    %v2516 = vadd.f32 %v2514, %v2515
    %v2517 = vrot.slane %v2516, 2
    %v2518 = vadd.f32 %v2516, %v2517
    %v2519 = vrot.slane %v2518, 1
    %v2520 = vadd.f32 %v2518, %v2519
    %v2521 = vadd.f32 %v2465, %v2469
    %v2522 = vadd.f32 %v2521, %v2473
    %v2523 = vadd.f32 %v2522, %v2477
    %v2524 = vadd.f32 %v2523, %v2481
    %v2525 = vadd.f32 %v2524, %v2485
    %v2526 = vadd.f32 %v2525, %v2489
    %v2527 = vadd.f32 %v2526, %v2493
    %v2528 = vrot.slane %v2527, 4
    %v2529 = vadd.f32 %v2527, %v2528
    %v2530 = vrot.slane %v2529, 2
    %v2531 = vadd.f32 %v2529, %v2530
    %v2532 = vrot.slane %v2531, 1
    %v2533 = vadd.f32 %v2531, %v2532
    %v2534 = vadd.f32 %v2466, %v2470
    %v2535 = vadd.f32 %v2534, %v2474
    %v2536 = vadd.f32 %v2535, %v2478
    %v2537 = vadd.f32 %v2536, %v2482
    %v2538 = vadd.f32 %v2537, %v2486
    %v2539 = vadd.f32 %v2538, %v2490
    %v2540 = vadd.f32 %v2539, %v2494
    %v2541 = vrot.slane %v2540, 4
    %v2542 = vadd.f32 %v2540, %v2541
    %v2543 = vrot.slane %v2542, 2
    %v2544 = vadd.f32 %v2542, %v2543
    %v2545 = vrot.slane %v2544, 1
    %v2546 = vadd.f32 %v2544, %v2545
    %s2547 = scalar_lea.vmem %s9, 1
    %v2548 = vld [vmem:[%s2547] ss:$2 sm:$0xf]
    %v2550 = vlaneseq
    %v2551 = vshrl.u32 %v2550, 7
    %v2552 = vsub.s32 0, %v2551
    %v2553 = vrot.slane %v2548, %v2552
    %v2554 = vlaneseq
    %v2555 = vshrl.u32 %v2554, 7
    %v2556 = vsub.s32 1, %v2555
    %v2557 = vrot.slane %v2548, %v2556
    %v2558 = vlaneseq
    %v2559 = vshrl.u32 %v2558, 7
    %v2560 = vsub.s32 2, %v2559
    %v2561 = vrot.slane %v2548, %v2560
    %v2562 = vlaneseq
    %v2563 = vshrl.u32 %v2562, 7
    %v2564 = vsub.s32 3, %v2563
    %v2565 = vrot.slane %v2548, %v2564
    %v2570 = vmul.f32 %v2507, %v2553
    %v2571 = vmul.f32 %v2520, %v2557
    %v2572 = vmul.f32 %v2533, %v2561
    %v2573 = vmul.f32 %v2546, %v2565
    %v2574 = vsel %vm2257, %v2570, 0.0
    %v2575 = vsel %vm2257, %v2571, 0.0
    %v2576 = vadd.f32 %v2574, %v2575
    %v2577 = vsel %vm2257, %v2572, 0.0
    %v2578 = vadd.f32 %v2576, %v2577
    %v2579 = vsel %vm2257, %v2573, 0.0
    %v2580 = vadd.f32 %v2578, %v2579
    %2581 = vadd.xlane.f32.xlu0 %v2580
    %v2582 = vpop.xlane.xlu0 %2581
    %v2583 = vld [vmem:[%s10] sm:$0x1]
    %v2585 = vlaneseq
    %v2586 = vshrl.u32 %v2585, 7
    %v2587 = vsub.s32 0, %v2586
    %v2588 = vrot.slane %v2583, %v2587
    %2589 = vrot.lane.b32.xlu0 %v2588, 127
    %v2590 = vpop.permute.xlu0 %2589
    %v2592 = vadd.f32 %v2582, %v2590
    %2594 = vrot.lane.b32.xlu0 %v2592, 1
    %v2595 = vpop.permute.xlu0 %2594
    %vm2597 = vcmask 8200
    %2598 = vst.msk [vmem:[#allocation10] sm:$0x1] %vm2597, %v2595
    // Predicated region
    $region62: #{tpu_custom_call.1} parent=1 // pred_check
      _
    $region63: #{tpu_custom_call.1} parent=1 // pred_check_branch
      %2600 = sbr.rel (0) target = $region65
    $region64: #{tpu_custom_call.1} parent=1 // pred_region
      %s2602 = ssub.s32 16, 16
      %2603 = vsyncadd [#allocation4], %s2602
      %s2605 = sshll.u32 [#allocation10], 4
      %s2606 = int_to_ptr.vmem [resolvable:$true] %s2605
      %2608 = dma.vmem_to_hbm [thread:$0]  %s2606, 16, %s11, [#allocation4]
    $region65: #{tpu_custom_call.1} parent=1 // pred_fallthru
      _
    // Predicated region
    $region66: #{tpu_custom_call.1} parent=1 // pred_check
      _
    $region67: #{tpu_custom_call.1} parent=1 // pred_check_branch
      %2610 = sbr.rel (0) target = $region69
    $region68: #{tpu_custom_call.1} parent=1 // pred_region
      _
    $region69: #{tpu_custom_call.1} parent=1 // pred_fallthru
      _
    // Predicated region
    $region70: #{tpu_custom_call.1} parent=1 // pred_check
      _
    $region71: #{tpu_custom_call.1} parent=1 // pred_check_branch
      %2612 = sbr.rel (0) target = $region73
    $region72: #{tpu_custom_call.1} parent=1 // pred_region
      %2613 = dma.done [#allocation4], 16
    $region73: #{tpu_custom_call.1} parent=1 // pred_fallthru
      _
    // Predicated region
    $region74: #{tpu_custom_call.1} parent=1 // pred_check
      _
    $region75: #{tpu_custom_call.1} parent=1 // pred_check_branch
      %2615 = sbr.rel (0) target = $region77
    $region76: #{tpu_custom_call.1} parent=1 // pred_region
      _
    $region77: #{tpu_custom_call.1} parent=1 // pred_fallthru
      _
    %2616 = vsyncpa [#allocation3], 1
    %2617 = vsyncpa [#allocation6], 1
    %2618 = vsyncpa [#allocation9], 1
    %2619 = vsyncpa [#allocation4], 1

</llo_original>
